<compile_context>
chip_gen: v7x
topology: tpu7x:2x2x1
jax: 0.10.0
libtpu: 0.0.40
codegen_flags: <defaults>
</compile_context>

<pallas_src>
import functools

import jax
import jax.numpy as jnp
from jax.experimental import pallas as pl
from jax.experimental.pallas import tpu as pltpu


# ----------------------------- Pallas kernels ------------------------------


def _conv3x3_kernel(x_ref, w_ref, b_ref, o_ref, col_ref, *pool_scr,
                    H, W, Cin, relu_in, relu_out, pool_out):
    """3x3 same-padding conv (+ fused bias / ReLU / optional 2x2 maxpool).

    x_ref   : (F, H, W, Cin)      bf16 input (F = 1 per-image, or N batch-folded)
    w_ref   : (9*Cin, TCo)        bf16 weight slab, rows ordered (kh, kw, cin)
    b_ref   : (1, TCo)            f32 bias
    o_ref   : (1, F*Ho*Wo, TCo)   bf16 output, rows ordered (f, h, w)
    col_ref : (F, H, W, 9*Cin)    bf16 VMEM im2col scratch
    pool_scr: optional (F*H*W, TCo) f32 VMEM scratch (only when pool_out)
    """
    F = x_ref.shape[0]
    K = 9 * Cin

    # Zero the 1-pixel frame of the im2col scratch so the border taps read
    # zero -- halo handled in-kernel, no wrapper jnp.pad / extra HBM traffic.
    zrow = jnp.zeros((F, 1, W, K), col_ref.dtype)
    col_ref[:, 0:1, :, :] = zrow
    col_ref[:, H - 1:H, :, :] = zrow
    if H > 2:
        zcol = jnp.zeros((F, H - 2, 1, K), col_ref.dtype)
        col_ref[:, 1:H - 1, 0:1, :] = zcol
        col_ref[:, 1:H - 1, W - 1:W, :] = zcol

    # im2col: nine lane-aligned slab copies; the previous layer's deferred
    # ReLU (select layers emit pre-ReLU) is fused into the copy.
    for kh in range(3):
        for kw in range(3):
            t = kh * 3 + kw
            h0, h1 = max(0, 1 - kh), min(H, H + 1 - kh)   # valid output rows
            w0, w1 = max(0, 1 - kw), min(W, W + 1 - kw)   # valid output cols
            src = x_ref[:, h0 + kh - 1:h1 + kh - 1, w0 + kw - 1:w1 + kw - 1, :]
            if relu_in:
                src = jnp.maximum(src, 0)
            col_ref[:, h0:h1, w0:w1, t * Cin:(t + 1) * Cin] = src

    # Single MXU matmul with K = 9*Cin, f32 accumulation; bias (+ReLU) epilogue.
    col = col_ref[...].reshape(F * H * W, K)
    y = jnp.dot(col, w_ref[...], preferred_element_type=jnp.float32) + b_ref[...]
    if relu_out:
        y = jnp.maximum(y, 0.0)

    if not pool_out:
        o_ref[0] = y.astype(o_ref.dtype)
        return

    # Fused 2x2 / stride-2 max pool (data already in VMEM, no HBM round trip).
    ps = pool_scr[0]
    R = F * H * W
    Hh, Wh = H // 2, W // 2
    ps[...] = y
    # Horizontal (W) pairs: even / odd rows of the (f, h, w)-ordered rows.
    yw = jnp.maximum(ps[pl.ds(0, R // 2, stride=2), :],
                     ps[pl.ds(1, R // 2, stride=2), :])      # rows (f, h, wh)
    ps[0:R // 2, :] = yw
    # Vertical (H) pairs: short static loop over (f, hh) row blocks.
    for f in range(F):
        for hh in range(Hh):
            r0 = (f * H + 2 * hh) * Wh
            o0 = (f * Hh + hh) * Wh
            blk = jnp.maximum(ps[r0:r0 + Wh, :], ps[r0 + Wh:r0 + 2 * Wh, :])
            o_ref[0, o0:o0 + Wh, :] = blk.astype(o_ref.dtype)


def _conv_first_kernel(x_ref, w_ref, b_ref, o_ref, *, H, W, relu_out):
    """First layer: taps pre-folded at the wrapper -> one (M, 32) x (32, Cout)."""
    Kp = x_ref.shape[-1]
    x = x_ref[0].reshape(H * W, Kp)
    y = jnp.dot(x, w_ref[...], preferred_element_type=jnp.float32) + b_ref[...]
    if relu_out:
        y = jnp.maximum(y, 0.0)
    o_ref[0] = y.astype(o_ref.dtype)


# ------------------------------ thin wrappers -------------------------------


def conv3x3(x, w, b, *, relu_in, relu_out, pool_out):
    """x: (N,H,W,Cin) bf16; w: (9*Cin, Cout) bf16; b: (1, Cout) f32.

    Returns (N, Ho*Wo, Cout) [per-image grid] or (1, N*Ho*Wo, Cout)
    [batch-folded], rows ordered (n, h, w); Ho/Wo are post-pool if pool_out."""
    N, H, W, Cin = x.shape
    K, Cout = w.shape
    assert K == 9 * Cin and Cout % 128 == 0 and Cin % 128 == 0
    assert H % 2 == 0 and W % 2 == 0
    TCo = min(Cout, 256)
    Ho, Wo = (H // 2, W // 2) if pool_out else (H, W)
    fold = H <= 8                       # small-spatial layers: fold batch into M
    F = N if fold else 1

    kern = functools.partial(_conv3x3_kernel, H=H, W=W, Cin=Cin,
                             relu_in=relu_in, relu_out=relu_out,
                             pool_out=pool_out)
    scratch = [pltpu.VMEM((F, H, W, K), jnp.bfloat16)]
    if pool_out:
        scratch.append(pltpu.VMEM((F * H * W, TCo), jnp.float32))

    if fold:
        grid = (Cout // TCo,)
        in_specs = [
            pl.BlockSpec((N, H, W, Cin), lambda co: (0, 0, 0, 0)),
            pl.BlockSpec((K, TCo), lambda co: (0, co)),
            pl.BlockSpec((1, TCo), lambda co: (0, co)),
        ]
        out_specs = pl.BlockSpec((1, N * Ho * Wo, TCo), lambda co: (0, 0, co))
        out_shape = jax.ShapeDtypeStruct((1, N * Ho * Wo, Cout), jnp.bfloat16)
        dims = ("parallel",)
    else:
        # co is the OUTER grid axis -> the weight slab's block index is
        # unchanged across the inner batch sweep, so it stays VMEM-resident.
        grid = (Cout // TCo, N)
        in_specs = [
            pl.BlockSpec((1, H, W, Cin), lambda co, n: (n, 0, 0, 0)),
            pl.BlockSpec((K, TCo), lambda co, n: (0, co)),
            pl.BlockSpec((1, TCo), lambda co, n: (0, co)),
        ]
        out_specs = pl.BlockSpec((1, Ho * Wo, TCo), lambda co, n: (n, 0, co))
        out_shape = jax.ShapeDtypeStruct((N, Ho * Wo, Cout), jnp.bfloat16)
        dims = ("parallel", "parallel")

    return pl.pallas_call(
        kern,
        out_shape=out_shape,
        grid=grid,
        in_specs=in_specs,
        out_specs=out_specs,
        scratch_shapes=scratch,
        compiler_params=pltpu.CompilerParams(dimension_semantics=dims),
    )(x, w, b)


def conv_first(patches, w, b, *, relu_out):
    """patches: (N,H,W,32) bf16 (27 folded taps + 5 zero lanes);
    w: (32, Cout) bf16; b: (1, Cout) f32."""
    N, H, W, Kp = patches.shape
    Cout = w.shape[1]
    TCo = min(Cout, 256)
    kern = functools.partial(_conv_first_kernel, H=H, W=W, relu_out=relu_out)
    return pl.pallas_call(
        kern,
        out_shape=jax.ShapeDtypeStruct((N, H * W, Cout), jnp.bfloat16),
        grid=(Cout // TCo, N),
        in_specs=[
            pl.BlockSpec((1, H, W, Kp), lambda co, n: (n, 0, 0, 0)),
            pl.BlockSpec((Kp, TCo), lambda co, n: (0, co)),
            pl.BlockSpec((1, TCo), lambda co, n: (0, co)),
        ],
        out_specs=pl.BlockSpec((1, H * W, TCo), lambda co, n: (n, 0, co)),
        compiler_params=pltpu.CompilerParams(
            dimension_semantics=("parallel", "parallel")),
    )(patches, w, b)


def _im2col_first(x):
    """Fold the 3x3x3 taps of the first conv into 27 (+5 zero pad = 32) chans."""
    N, H, W, _ = x.shape
    xp = jnp.pad(x, ((0, 0), (1, 1), (1, 1), (0, 0)))
    cols = [xp[:, kh:kh + H, kw:kw + W, :] for kh in range(3) for kw in range(3)]
    cols.append(jnp.zeros((N, H, W, 5), x.dtype))        # lane pad 27 -> 32
    return jnp.concatenate(cols, axis=-1)                # (N, H, W, 32)


# ----------------------------- VGG19 definition -----------------------------

# torchvision vgg19().features convs up to layer 28 (the last one needed).
CONV_CHANNELS = [
    (3, 64), (64, 64),                                   # layers 0, 2
    (64, 128), (128, 128),                               # layers 5, 7
    (128, 256), (256, 256), (256, 256), (256, 256),      # layers 10,12,14,16
    (256, 512), (512, 512), (512, 512), (512, 512),      # layers 19,21,23,25
    (512, 512),                                          # layer 28
]
SELECT_CONV = (0, 2, 4, 8, 12)   # conv indices of torchvision layers 0,5,10,19,28
POOL_AFTER = (1, 3, 7, 11)       # MaxPool2d follows these conv indices


def _padc(c):
    return 128 if c < 128 else c


def init_vgg19_params(key):
    """Deterministic He-style init, pre-packed into the kernel layout:
    weight (9*Cin_p, Cout_p) bf16 (rows = (kh,kw,cin)), bias (1, Cout_p) f32.
    64-channel dims are zero-padded to 128 for lane-dense activations."""
    params = []
    cin_p_flow = None
    for idx, (cin, cout) in enumerate(CONV_CHANNELS):
        key, k_w, k_b = jax.random.split(key, 3)
        std = (2.0 / (9 * cin)) ** 0.5
        w = jax.random.normal(k_w, (3, 3, cin, cout), jnp.float32) * std
        b = jax.random.normal(k_b, (cout,), jnp.float32) * 0.01
        cout_p = _padc(cout)
        if idx == 0:
            w_p = jnp.zeros((32, cout_p), jnp.float32).at[:27, :cout].set(
                w.reshape(27, cout))
        else:
            cin_p = cin_p_flow
            w_full = jnp.zeros((3, 3, cin_p, cout_p), jnp.float32)
            w_full = w_full.at[:, :, :cin, :cout].set(w)
            w_p = w_full.reshape(9 * cin_p, cout_p)
        b_p = jnp.zeros((1, cout_p), jnp.float32).at[0, :cout].set(b)
        params.append((w_p.astype(jnp.bfloat16), b_p, cout, cout_p))
        cin_p_flow = cout_p
    return params


def vggnet_forward(x_nchw, params):
    """Replicates VGGNet.forward: returns [feat0, feat5, feat10, feat19, feat28],
    each NCHW float32 like PyTorch (pre-ReLU conv outputs).  Note: activations
    travel in bf16 between layers (f32 MXU accumulation), so features drift
    slightly from a pure-f32 reference."""
    x = jnp.transpose(x_nchw, (0, 2, 3, 1)).astype(jnp.bfloat16)  # NCHW -> NHWC
    N, H, W, _ = x.shape
    features = []
    pending_relu = False
    act = None
    for idx, (w, b, cout, cout_p) in enumerate(params):
        is_select = idx in SELECT_CONV
        do_pool = idx in POOL_AFTER
        if idx == 0:
            out3 = conv_first(_im2col_first(x), w, b, relu_out=not is_select)
        else:
            out3 = conv3x3(act, w, b, relu_in=pending_relu,
                           relu_out=not is_select, pool_out=do_pool)
        if do_pool:
            H, W = H // 2, W // 2
        act = out3.reshape(N, H, W, cout_p)     # metadata-only reshape
        if is_select:
            feat = act[..., :cout].astype(jnp.float32)
            features.append(jnp.transpose(feat, (0, 3, 1, 2)))   # NCHW out
            pending_relu = True        # ReLU deferred into the next conv kernel
            if len(features) == len(SELECT_CONV):
                break                  # later layers don't affect the features
        else:
            pending_relu = False       # ReLU (and pool) fused in this conv
    return features


if __name__ == "__main__":
    key = jax.random.PRNGKey(0)
    kx, kp = jax.random.split(key)
    # PyTorch-convention NCHW input (3 channels required by VGG).
    x = jax.random.normal(kx, (2, 3, 32, 32), jnp.float32)
    params = init_vgg19_params(kp)

    feats = vggnet_forward(x, params)
    jax.block_until_ready(feats)

    expected = [(2, 64, 32, 32), (2, 128, 16, 16), (2, 256, 8, 8),
                (2, 512, 4, 4), (2, 512, 2, 2)]
    assert [tuple(f.shape) for f in feats] == expected
    assert all(bool(jnp.all(jnp.isfinite(f))) for f in feats)
    print("KERNEL_OK")
</pallas_src>

<mosaic_0001>
module attributes {stable_mosaic.version = 11 : i64} {
  func.func @_conv_first_kernel(%arg0: i32, %arg1: i32, %arg2: memref<1x32x32x32xbf16, #tpu.memory_space<vmem>>, %arg3: memref<32x128xbf16, #tpu.memory_space<vmem>>, %arg4: memref<1x128xf32, #tpu.memory_space<vmem>>, %arg5: memref<1x1024x128xbf16, #tpu.memory_space<vmem>>) attributes {dimension_semantics = [#tpu.dimension_semantics<parallel>, #tpu.dimension_semantics<parallel>], iteration_bounds = array<i64: 1, 2>, scalar_prefetch = 0 : i64, scratch_operands = 0 : i64, tpu.core_type = #tpu.core_type<tc>, window_params = [{transform_indices = @transform_0, window_bounds = array<i64: 1, 32, 32, 32>}, {transform_indices = @transform_1, window_bounds = array<i64: 32, 128>}, {transform_indices = @transform_2, window_bounds = array<i64: 1, 128>}, {transform_indices = @transform_3, window_bounds = array<i64: 1, 1024, 128>}]} {
    %c0 = arith.constant 0 : index
    %c0_0 = arith.constant 0 : index
    %c0_1 = arith.constant 0 : index
    %c0_2 = arith.constant 0 : index
    %0 = vector.load %arg2[%c0, %c0_0, %c0_1, %c0_2] : memref<1x32x32x32xbf16, #tpu.memory_space<vmem>>, vector<1x32x32x32xbf16>
    %1 = vector.shape_cast %0 : vector<1x32x32x32xbf16> to vector<32x32x32xbf16>
    %2 = vector.shape_cast %1 : vector<32x32x32xbf16> to vector<1024x32xbf16>
    %c0_3 = arith.constant 0 : index
    %c0_4 = arith.constant 0 : index
    %3 = vector.load %arg3[%c0_3, %c0_4] : memref<32x128xbf16, #tpu.memory_space<vmem>>, vector<32x128xbf16>
    %cst = arith.constant dense<0.000000e+00> : vector<1024x128xf32>
    %4 = tpu.matmul %2, %3, %cst {dimension_numbers = #tpu.dot_dimension_numbers<[1], [0], [0], [1], [0, 0, 1, 1], [], []>} : vector<1024x32xbf16>, vector<32x128xbf16>, vector<1024x128xf32> -> vector<1024x128xf32>
    %c0_5 = arith.constant 0 : index
    %c0_6 = arith.constant 0 : index
    %5 = vector.load %arg4[%c0_5, %c0_6] : memref<1x128xf32, #tpu.memory_space<vmem>>, vector<1x128xf32>
    %6 = vector.broadcast %5 : vector<1x128xf32> to vector<1024x128xf32>
    %7 = arith.addf %4, %6 : vector<1024x128xf32>
    %8 = arith.truncf %7 : vector<1024x128xf32> to vector<1024x128xbf16>
    %c0_7 = arith.constant 0 : index
    %c0_8 = arith.constant 0 : index
    %c0_9 = arith.constant 0 : index
    %9 = vector.load %arg5[%c0_7, %c0_8, %c0_9] : memref<1x1024x128xbf16, #tpu.memory_space<vmem>>, vector<1x1024x128xbf16>
    %10 = vector.shape_cast %9 : vector<1x1024x128xbf16> to vector<1024x128xbf16>
    %11 = vector.shape_cast %8 : vector<1024x128xbf16> to vector<1x1024x128xbf16>
    tpu.vector_store %arg5[%c0_7, %c0_8, %c0_9], %11 {strides = array<i32>} : memref<1x1024x128xbf16, #tpu.memory_space<vmem>>, vector<1x1024x128xbf16>,
    return
  }
  func.func @transform_0(%arg0: i32, %arg1: i32) -> (i32, i32, i32, i32) {
    %c0_i32 = arith.constant 0 : i32
    %c0_i32_0 = arith.constant 0 : i32
    %c0_i32_1 = arith.constant 0 : i32
    %c0_i32_2 = arith.constant 0 : i32
    return %arg1, %c0_i32, %c0_i32_0, %c0_i32_1 : i32, i32, i32, i32
  }
  func.func @transform_1(%arg0: i32, %arg1: i32) -> (i32, i32) {
    %c0_i32 = arith.constant 0 : i32
    %c0_i32_0 = arith.constant 0 : i32
    return %c0_i32, %arg0 : i32, i32
  }
  func.func @transform_2(%arg0: i32, %arg1: i32) -> (i32, i32) {
    %c0_i32 = arith.constant 0 : i32
    %c0_i32_0 = arith.constant 0 : i32
    return %c0_i32, %arg0 : i32, i32
  }
  func.func @transform_3(%arg0: i32, %arg1: i32) -> (i32, i32, i32) {
    %c0_i32 = arith.constant 0 : i32
    %c0_i32_0 = arith.constant 0 : i32
    return %arg1, %c0_i32, %arg0 : i32, i32, i32
  }
}

</mosaic_0001>

<llo_original>
// kernel: tpu_custom_call.1
$region0: #{tpu_custom_call.1}
  #allocation0 [shape = 'u32[]', space=smem, size = 0x4, offset = 0x4, fixed_abs, tag = 'smem constant byte address 0x4 - core index']
  #allocation1 [shape = 'u32[144,128]{1,0:T(1,128)}', space=vmem, size = 0x12000, scoped, tag = 'internal scratch']
  %s0 = inlined_call_operand.hbm [shape: bf16[2,32,32,32], index: 0, kind: input, shape index: {}]
  %s1 = inlined_call_operand.hbm [shape: bf16[32,128], index: 1, kind: input, shape index: {}]
  %s2 = inlined_call_operand.vmem [shape: f32[1,128], index: 2, kind: input, shape index: {}]
  %s3 = inlined_call_operand.hbm [shape: bf16[2,1024,128], index: 3, kind: output, shape index: {}]
  %s4 = sld [smem:[#allocation0]]
  $region53: #{tpu_custom_call.1} parent=0
    _
  %s6 = ssub.s32 1, %s4
  %s7 = scalar_select 0, %s6, %s4
  $region1: #{tpu_custom_call.1} parent=0
    #allocation2 [shape = 'u8[524288]{0}', space=vmem, size = 0x80000, scoped, tag = 'input window, operand 0']
    #allocation3 [shape = 's32[2]{0}', space=sflag, size = 0x8, scoped, tag = 'scoped memory for tpu_custom_call.1']
    #allocation4 [shape = 's32[2]{0}', space=sflag, size = 0x8, scoped, tag = 'scoped memory for tpu_custom_call.1']
    #allocation5 [shape = 'u8[8192]{0}', space=vmem, size = 0x2000, scoped, tag = 'input window, operand 1, single buffered']
    #allocation6 [shape = 's32[1]{0}', space=sflag, size = 0x4, scoped, tag = 'scoped memory for tpu_custom_call.1']
    #allocation7 [shape = 'u8[524288]{0}', space=vmem, size = 0x80000, scoped, tag = 'output window, operand 0']
    %8 = vsyncpa [#allocation3], 0
    %s9 = scalar_lea.sflag [#allocation3], 1
    %10 = vsyncpa %s9, 0
    %11 = vsyncpa [#allocation6], 0
    %12 = vsyncpa [#allocation4], 0
    %s13 = scalar_lea.sflag [#allocation4], 1
    %14 = vsyncpa %s13, 0
    loop: start=0, step=1, limit=4
    $region2: #{tpu_custom_call.1} parent=1 // loop_pre_header
      _
    $region3: #{tpu_custom_call.1} parent=1 // loop_header
      %s16 = sphi 0, %s20
      %p17 = scmp.ge.s32.totalorder %s16, 4
      %s23 = sphi 0, %s35
      %s24 = sphi 0, %s31
      %s25 = sphi 0, %s23
      %s26 = sphi 0, %s24
      %s27 = sphi 0, %s25
      %s28 = sphi 0, %s26
      %s38 = sphi 0, %s40
      %s41 = sphi 0, %s38
      %s42 = sphi 0, %s41
      %s58 = sphi 0, %s42
      %s64 = sphi 0, %s66
      %s67 = sphi 0, %s64
      %s68 = sphi 0, %s67
      %s84 = sphi 0, %s68
      %s90 = sphi 0, %s92
      %s93 = sphi 0, %s90
      %s94 = sphi 0, %s93
      %s110 = sphi 0, %s94
      %s118 = sphi 0, %s120
      %s121 = sphi 0, %s118
      %s122 = sphi 0, %s121
      %s138 = sphi 0, %s122
    $region4: #{tpu_custom_call.1} parent=1 // loop_header_branch
      %19 = sbr.rel (%p17) target = $region8
    $region5: #{tpu_custom_call.1} parent=1 // loop_body
      %s21 = ssub.s32 %s16, 1
      %s22 = ssub.s32 %s16, 2
      %s29 = sadd.s32 1, %s24
      %p30 = scmp.ge.s32.totalorder %s29, 2
      %s31 = scalar_select %p30, 0, %s29
      %s32 = sadd.s32 1, %s23
      %s33 = scalar_select %p30, %s32, %s23
      %p34 = scmp.ge.s32.totalorder %s33, 1
      %s35 = scalar_select %p34, 0, %s33
      %s36 = ssub.s32 %s24, %s31
      %p37 = scmp.eq.s32.totalorder %s36, 0
      %s39 = sadd.s32 %s38, 1
      %s40 = scalar_select %p37, %s38, %s39
      %p43 = pneg %p37
      %p44 = scmp.eq.s32.totalorder %s16, 1
      %p45 = por %p43, %p44
      %p46 = scmp.ne.s32.totalorder %s38, %s41
      %p47 = scmp.eq.s32.totalorder %s16, 0
      %p48 = por %p46, %p47
      %p49 = scmp.ne.s32.totalorder %s38, %s41
      %p50 = scmp.eq.s32.totalorder %s21, 1
      %p51 = por %p49, %p50
      %p52 = scmp.ne.s32.totalorder %s41, %s42
      %p53 = scmp.eq.s32.totalorder %s21, 0
      %p54 = por %p52, %p53
      %p55 = scmp.ne.s32.totalorder %s41, %s42
      %p56 = scmp.eq.s32.totalorder %s22, 1
      %p57 = por %p55, %p56
      %p59 = scmp.ne.s32.totalorder %s42, %s58
      %p60 = scmp.eq.s32.totalorder %s22, 0
      %p61 = por %p59, %p60
      %s62 = ssub.s32 %s23, %s35
      %p63 = scmp.eq.s32.totalorder %s62, 0
      %s65 = sadd.s32 %s64, 1
      %s66 = scalar_select %p63, %s64, %s65
      %p69 = pneg %p63
      %p70 = scmp.eq.s32.totalorder %s16, 1
      %p71 = por %p69, %p70
      %p72 = scmp.ne.s32.totalorder %s64, %s67
      %p73 = scmp.eq.s32.totalorder %s16, 0
      %p74 = por %p72, %p73
      %p75 = scmp.ne.s32.totalorder %s64, %s67
      %p76 = scmp.eq.s32.totalorder %s21, 1
      %p77 = por %p75, %p76
      %p78 = scmp.ne.s32.totalorder %s67, %s68
      %p79 = scmp.eq.s32.totalorder %s21, 0
      %p80 = por %p78, %p79
      %p81 = scmp.ne.s32.totalorder %s67, %s68
      %p82 = scmp.eq.s32.totalorder %s22, 1
      %p83 = por %p81, %p82
      %p85 = scmp.ne.s32.totalorder %s68, %s84
      %p86 = scmp.eq.s32.totalorder %s22, 0
      %p87 = por %p85, %p86
      %s88 = ssub.s32 %s23, %s35
      %p89 = scmp.eq.s32.totalorder %s88, 0
      %s91 = sadd.s32 %s90, 1
      %s92 = scalar_select %p89, %s90, %s91
      %p95 = pneg %p89
      %p96 = scmp.eq.s32.totalorder %s16, 1
      %p97 = por %p95, %p96
      %p98 = scmp.ne.s32.totalorder %s90, %s93
      %p99 = scmp.eq.s32.totalorder %s16, 0
      %p100 = por %p98, %p99
      %p101 = scmp.ne.s32.totalorder %s90, %s93
      %p102 = scmp.eq.s32.totalorder %s21, 1
      %p103 = por %p101, %p102
      %p104 = scmp.ne.s32.totalorder %s93, %s94
      %p105 = scmp.eq.s32.totalorder %s21, 0
      %p106 = por %p104, %p105
      %p107 = scmp.ne.s32.totalorder %s93, %s94
      %p108 = scmp.eq.s32.totalorder %s22, 1
      %p109 = por %p107, %p108
      %p111 = scmp.ne.s32.totalorder %s94, %s110
      %p112 = scmp.eq.s32.totalorder %s22, 0
      %p113 = por %p111, %p112
      %s114 = ssub.s32 %s24, %s31
      %s115 = ssub.s32 %s23, %s35
      %s116 = sor.u32 %s114, %s115
      %p117 = scmp.eq.s32.totalorder %s116, 0
      %s119 = sadd.s32 %s118, 1
      %s120 = scalar_select %p117, %s118, %s119
      %p123 = pneg %p117
      %p124 = scmp.eq.s32.totalorder %s16, 1
      %p125 = por %p123, %p124
      %p126 = scmp.ne.s32.totalorder %s118, %s121
      %p127 = scmp.eq.s32.totalorder %s16, 0
      %p128 = por %p126, %p127
      %p129 = scmp.ne.s32.totalorder %s118, %s121
      %p130 = scmp.eq.s32.totalorder %s21, 1
      %p131 = por %p129, %p130
      %p132 = scmp.ne.s32.totalorder %s121, %s122
      %p133 = scmp.eq.s32.totalorder %s21, 0
      %p134 = por %p132, %p133
      %p135 = scmp.ne.s32.totalorder %s121, %s122
      %p136 = scmp.eq.s32.totalorder %s22, 1
      %p137 = por %p135, %p136
      %p139 = scmp.ne.s32.totalorder %s122, %s138
      %p140 = scmp.eq.s32.totalorder %s22, 0
      %p141 = por %p139, %p140
      %p142 = scmp.le.s32.totalorder 1, %s16
      %p143 = scmp.lt.s32.totalorder %s16, 3
      %p144 = pnand %p142, %p143
      %p145 = pneg %p144
      // Predicated region
      $region9: #{tpu_custom_call.1} parent=5 // pred_check
        _
      $region10: #{tpu_custom_call.1} parent=5 // pred_check_branch
        %147 = sbr.rel (%p144) target = $region12
      $region11: #{tpu_custom_call.1} parent=5 // pred_region
        %s148 = ssub.s32 %s16, 1
        // Predicated region
        $region13: #{tpu_custom_call.1} parent=11 // pred_check
          %p149 = pneg %p80
        $region14: #{tpu_custom_call.1} parent=11 // pred_check_branch
          %151 = sbr.rel (%p149) target = $region16
        $region15: #{tpu_custom_call.1} parent=11 // pred_region
          %s153 = ssub.s32 256, 256
          %154 = vsyncadd [#allocation6], %s153
          %s155 = smul.addr %s25, 64
          %s156 = scalar_lea.hbm %s1, %s155
          %s157 = sshll.u32 [#allocation5], 4
          %s158 = int_to_ptr.vmem [resolvable:$true] %s157
          %163 = dma.hbm_to_vmem [thread:$0]  %s156, 256, %s158, [#allocation6], 64, 64, 4
        $region16: #{tpu_custom_call.1} parent=11 // pred_fallthru
          _
        // Predicated region
        $region17: #{tpu_custom_call.1} parent=11 // pred_check
          %p164 = pneg %p106
        $region18: #{tpu_custom_call.1} parent=11 // pred_check_branch
          %166 = sbr.rel (%p164) target = $region20
        $region19: #{tpu_custom_call.1} parent=11 // pred_region
          %p167 = scmp.lt.s32.totalorder %s25, 0
          %s168 = scalar_select %p167, %s25, 0
          %s169 = scalar_lea.vmem %s2, %s168
        $region20: #{tpu_custom_call.1} parent=11 // pred_fallthru
          _
      $region12: #{tpu_custom_call.1} parent=5 // pred_fallthru
        _
      %p170 = scmp.lt.s32.totalorder %s16, 2
      // Predicated region
      $region21: #{tpu_custom_call.1} parent=5 // pred_check
        %p171 = pneg %p170
      $region22: #{tpu_custom_call.1} parent=5 // pred_check_branch
        %173 = sbr.rel (%p171) target = $region24
      $region23: #{tpu_custom_call.1} parent=5 // pred_region
        // Predicated region
        $region25: #{tpu_custom_call.1} parent=23 // pred_check
          %p174 = pneg %p48
        $region26: #{tpu_custom_call.1} parent=23 // pred_check_branch
          %176 = sbr.rel (%p174) target = $region28
        $region27: #{tpu_custom_call.1} parent=23 // pred_region
          %s177 = sand.u32 %s38, 1
          %s178 = scalar_lea.sflag [#allocation3], %s177
          %s179 = sand.u32 %s38, 1
          %s180 = smul.addr %s179, 512
          %s181 = scalar_lea.vmem [#allocation2], %s180
          %s183 = ssub.s32 8192, 8192
          %184 = vsyncadd %s178, %s183
          %s185 = smul.addr %s24, 128
          %s186 = smul.addr %s185, 64
          %s187 = scalar_lea.hbm %s0, %s186
          %s188 = sshll.u32 %s181, 4
          %s189 = int_to_ptr.vmem [resolvable:$true] %s188
          %194 = dma.hbm_to_vmem [thread:$0]  %s187, 8192, %s189, %s178, 64, 64, 4
        $region28: #{tpu_custom_call.1} parent=23 // pred_fallthru
          _
      $region24: #{tpu_custom_call.1} parent=5 // pred_fallthru
        _
      %p195 = scmp.le.s32.totalorder 1, %s16
      %p196 = scmp.lt.s32.totalorder %s16, 3
      %p197 = pnand %p195, %p196
      %p198 = pneg %p197
      // Predicated region
      $region29: #{tpu_custom_call.1} parent=5 // pred_check
        _
      $region30: #{tpu_custom_call.1} parent=5 // pred_check_branch
        %200 = sbr.rel (%p197) target = $region32
      $region31: #{tpu_custom_call.1} parent=5 // pred_region
        %s201 = ssub.s32 %s16, 1
        %s202 = sand.u32 %s41, 1
        %s203 = scalar_lea.sflag [#allocation3], %s202
        %s204 = sand.u32 %s41, 1
        %s205 = smul.addr %s204, 512
        %s206 = scalar_lea.vmem [#allocation2], %s205
        // Predicated region
        $region33: #{tpu_custom_call.1} parent=31 // pred_check
          %p207 = pneg %p54
        $region34: #{tpu_custom_call.1} parent=31 // pred_check_branch
          %209 = sbr.rel (%p207) target = $region36
        $region35: #{tpu_custom_call.1} parent=31 // pred_region
          %210 = dma.done %s203, 8192
        $region36: #{tpu_custom_call.1} parent=31 // pred_fallthru
          _
        // Predicated region
        $region37: #{tpu_custom_call.1} parent=31 // pred_check
          %p211 = pneg %p80
        $region38: #{tpu_custom_call.1} parent=31 // pred_check_branch
          %213 = sbr.rel (%p211) target = $region40
        $region39: #{tpu_custom_call.1} parent=31 // pred_region
          %214 = dma.done [#allocation6], 256
        $region40: #{tpu_custom_call.1} parent=31 // pred_fallthru
          _
        %s215 = sand.u32 %s41, 1
        %s216 = scalar_lea.sflag [#allocation3], %s215
        %s217 = sand.u32 %s41, 1
        %s218 = smul.addr %s217, 512
        %s219 = scalar_lea.vmem [#allocation2], %s218
        %p220 = pneg %p54
        %p221 = pneg %p51
        %p222 = pneg %p80
        %p223 = pneg %p77
        %p224 = scmp.lt.s32.totalorder %s25, 0
        %s225 = scalar_select %p224, %s25, 0
        %s226 = scalar_lea.vmem %s2, %s225
        %p227 = pneg %p106
        %p228 = pneg %p103
        %p229 = pneg %p134
        %p230 = pneg %p131
        %s231 = sand.u32 %s121, 1
        %s232 = scalar_lea.sflag [#allocation4], %s231
        %s233 = sand.u32 %s121, 1
        %s234 = smul.addr %s233, 512
        %s235 = scalar_lea.vmem [#allocation7], %s234
        %p236 = scmp.lt.s32.totalorder %s25, 0
        %s237 = scalar_select %p236, %s25, 0
        %s238 = scalar_lea.vmem %s2, %s237
        %v240 = vld [vmem:[%s206] sm:$0xf]
        %v241 = vld [vmem:[%s206 + $0x4] sm:$0xf]
        %v242 = vld [vmem:[%s206 + $0x8] sm:$0xf]
        %v243 = vld [vmem:[%s206 + $0xc] sm:$0xf]
        %v244 = vld [vmem:[%s206 + $0x10] sm:$0xf]
        %v245 = vld [vmem:[%s206 + $0x14] sm:$0xf]
        %v246 = vld [vmem:[%s206 + $0x18] sm:$0xf]
        %v247 = vld [vmem:[%s206 + $0x1c] sm:$0xf]
        %v248 = vld [vmem:[%s206 + $0x20] sm:$0xf]
        %v249 = vld [vmem:[%s206 + $0x24] sm:$0xf]
        %v250 = vld [vmem:[%s206 + $0x28] sm:$0xf]
        %v251 = vld [vmem:[%s206 + $0x2c] sm:$0xf]
        %v252 = vld [vmem:[%s206 + $0x30] sm:$0xf]
        %v253 = vld [vmem:[%s206 + $0x34] sm:$0xf]
        %v254 = vld [vmem:[%s206 + $0x38] sm:$0xf]
        %v255 = vld [vmem:[%s206 + $0x3c] sm:$0xf]
        %v256 = vld [vmem:[%s206 + $0x40] sm:$0xf]
        %v257 = vld [vmem:[%s206 + $0x44] sm:$0xf]
        %v258 = vld [vmem:[%s206 + $0x48] sm:$0xf]
        %v259 = vld [vmem:[%s206 + $0x4c] sm:$0xf]
        %v260 = vld [vmem:[%s206 + $0x50] sm:$0xf]
        %v261 = vld [vmem:[%s206 + $0x54] sm:$0xf]
        %v262 = vld [vmem:[%s206 + $0x58] sm:$0xf]
        %v263 = vld [vmem:[%s206 + $0x5c] sm:$0xf]
        %v264 = vld [vmem:[%s206 + $0x60] sm:$0xf]
        %v265 = vld [vmem:[%s206 + $0x64] sm:$0xf]
        %v266 = vld [vmem:[%s206 + $0x68] sm:$0xf]
        %v267 = vld [vmem:[%s206 + $0x6c] sm:$0xf]
        %v268 = vld [vmem:[%s206 + $0x70] sm:$0xf]
        %v269 = vld [vmem:[%s206 + $0x74] sm:$0xf]
        %v270 = vld [vmem:[%s206 + $0x78] sm:$0xf]
        %v271 = vld [vmem:[%s206 + $0x7c] sm:$0xf]
        %v272 = vld [vmem:[%s206 + $0x80] sm:$0xf]
        %v273 = vld [vmem:[%s206 + $0x84] sm:$0xf]
        %v274 = vld [vmem:[%s206 + $0x88] sm:$0xf]
        %v275 = vld [vmem:[%s206 + $0x8c] sm:$0xf]
        %v276 = vld [vmem:[%s206 + $0x90] sm:$0xf]
        %v277 = vld [vmem:[%s206 + $0x94] sm:$0xf]
        %v278 = vld [vmem:[%s206 + $0x98] sm:$0xf]
        %v279 = vld [vmem:[%s206 + $0x9c] sm:$0xf]
        %v280 = vld [vmem:[%s206 + $0xa0] sm:$0xf]
        %v281 = vld [vmem:[%s206 + $0xa4] sm:$0xf]
        %v282 = vld [vmem:[%s206 + $0xa8] sm:$0xf]
        %v283 = vld [vmem:[%s206 + $0xac] sm:$0xf]
        %v284 = vld [vmem:[%s206 + $0xb0] sm:$0xf]
        %v285 = vld [vmem:[%s206 + $0xb4] sm:$0xf]
        %v286 = vld [vmem:[%s206 + $0xb8] sm:$0xf]
        %v287 = vld [vmem:[%s206 + $0xbc] sm:$0xf]
        %v288 = vld [vmem:[%s206 + $0xc0] sm:$0xf]
        %v289 = vld [vmem:[%s206 + $0xc4] sm:$0xf]
        %v290 = vld [vmem:[%s206 + $0xc8] sm:$0xf]
        %v291 = vld [vmem:[%s206 + $0xcc] sm:$0xf]
        %v292 = vld [vmem:[%s206 + $0xd0] sm:$0xf]
        %v293 = vld [vmem:[%s206 + $0xd4] sm:$0xf]
        %v294 = vld [vmem:[%s206 + $0xd8] sm:$0xf]
        %v295 = vld [vmem:[%s206 + $0xdc] sm:$0xf]
        %v296 = vld [vmem:[%s206 + $0xe0] sm:$0xf]
        %v297 = vld [vmem:[%s206 + $0xe4] sm:$0xf]
        %v298 = vld [vmem:[%s206 + $0xe8] sm:$0xf]
        %v299 = vld [vmem:[%s206 + $0xec] sm:$0xf]
        %v300 = vld [vmem:[%s206 + $0xf0] sm:$0xf]
        %v301 = vld [vmem:[%s206 + $0xf4] sm:$0xf]
        %v302 = vld [vmem:[%s206 + $0xf8] sm:$0xf]
        %v303 = vld [vmem:[%s206 + $0xfc] sm:$0xf]
        %v304 = vld [vmem:[%s206 + $0x100] sm:$0xf]
        %v305 = vld [vmem:[%s206 + $0x104] sm:$0xf]
        %v306 = vld [vmem:[%s206 + $0x108] sm:$0xf]
        %v307 = vld [vmem:[%s206 + $0x10c] sm:$0xf]
        %v308 = vld [vmem:[%s206 + $0x110] sm:$0xf]
        %v309 = vld [vmem:[%s206 + $0x114] sm:$0xf]
        %v310 = vld [vmem:[%s206 + $0x118] sm:$0xf]
        %v311 = vld [vmem:[%s206 + $0x11c] sm:$0xf]
        %v312 = vld [vmem:[%s206 + $0x120] sm:$0xf]
        %v313 = vld [vmem:[%s206 + $0x124] sm:$0xf]
        %v314 = vld [vmem:[%s206 + $0x128] sm:$0xf]
        %v315 = vld [vmem:[%s206 + $0x12c] sm:$0xf]
        %v316 = vld [vmem:[%s206 + $0x130] sm:$0xf]
        %v317 = vld [vmem:[%s206 + $0x134] sm:$0xf]
        %v318 = vld [vmem:[%s206 + $0x138] sm:$0xf]
        %v319 = vld [vmem:[%s206 + $0x13c] sm:$0xf]
        %v320 = vld [vmem:[%s206 + $0x140] sm:$0xf]
        %v321 = vld [vmem:[%s206 + $0x144] sm:$0xf]
        %v322 = vld [vmem:[%s206 + $0x148] sm:$0xf]
        %v323 = vld [vmem:[%s206 + $0x14c] sm:$0xf]
        %v324 = vld [vmem:[%s206 + $0x150] sm:$0xf]
        %v325 = vld [vmem:[%s206 + $0x154] sm:$0xf]
        %v326 = vld [vmem:[%s206 + $0x158] sm:$0xf]
        %v327 = vld [vmem:[%s206 + $0x15c] sm:$0xf]
        %v328 = vld [vmem:[%s206 + $0x160] sm:$0xf]
        %v329 = vld [vmem:[%s206 + $0x164] sm:$0xf]
        %v330 = vld [vmem:[%s206 + $0x168] sm:$0xf]
        %v331 = vld [vmem:[%s206 + $0x16c] sm:$0xf]
        %v332 = vld [vmem:[%s206 + $0x170] sm:$0xf]
        %v333 = vld [vmem:[%s206 + $0x174] sm:$0xf]
        %v334 = vld [vmem:[%s206 + $0x178] sm:$0xf]
        %v335 = vld [vmem:[%s206 + $0x17c] sm:$0xf]
        %v336 = vld [vmem:[%s206 + $0x180] sm:$0xf]
        %v337 = vld [vmem:[%s206 + $0x184] sm:$0xf]
        %v338 = vld [vmem:[%s206 + $0x188] sm:$0xf]
        %v339 = vld [vmem:[%s206 + $0x18c] sm:$0xf]
        %v340 = vld [vmem:[%s206 + $0x190] sm:$0xf]
        %v341 = vld [vmem:[%s206 + $0x194] sm:$0xf]
        %v342 = vld [vmem:[%s206 + $0x198] sm:$0xf]
        %v343 = vld [vmem:[%s206 + $0x19c] sm:$0xf]
        %v344 = vld [vmem:[%s206 + $0x1a0] sm:$0xf]
        %v345 = vld [vmem:[%s206 + $0x1a4] sm:$0xf]
        %v346 = vld [vmem:[%s206 + $0x1a8] sm:$0xf]
        %v347 = vld [vmem:[%s206 + $0x1ac] sm:$0xf]
        %v348 = vld [vmem:[%s206 + $0x1b0] sm:$0xf]
        %v349 = vld [vmem:[%s206 + $0x1b4] sm:$0xf]
        %v350 = vld [vmem:[%s206 + $0x1b8] sm:$0xf]
        %v351 = vld [vmem:[%s206 + $0x1bc] sm:$0xf]
        %v352 = vld [vmem:[%s206 + $0x1c0] sm:$0xf]
        %v353 = vld [vmem:[%s206 + $0x1c4] sm:$0xf]
        %v354 = vld [vmem:[%s206 + $0x1c8] sm:$0xf]
        %v355 = vld [vmem:[%s206 + $0x1cc] sm:$0xf]
        %v356 = vld [vmem:[%s206 + $0x1d0] sm:$0xf]
        %v357 = vld [vmem:[%s206 + $0x1d4] sm:$0xf]
        %v358 = vld [vmem:[%s206 + $0x1d8] sm:$0xf]
        %v359 = vld [vmem:[%s206 + $0x1dc] sm:$0xf]
        %v360 = vld [vmem:[%s206 + $0x1e0] sm:$0xf]
        %v361 = vld [vmem:[%s206 + $0x1e4] sm:$0xf]
        %v362 = vld [vmem:[%s206 + $0x1e8] sm:$0xf]
        %v363 = vld [vmem:[%s206 + $0x1ec] sm:$0xf]
        %v364 = vld [vmem:[%s206 + $0x1f0] sm:$0xf]
        %v365 = vld [vmem:[%s206 + $0x1f4] sm:$0xf]
        %v366 = vld [vmem:[%s206 + $0x1f8] sm:$0xf]
        %v367 = vld [vmem:[%s206 + $0x1fc] sm:$0xf]
        %v368 = vld [vmem:[#allocation5] sm:$0xf]
        %v369 = vld [vmem:[#allocation5 + $0x4] sm:$0xf]
        %v370 = vld [vmem:[#allocation5 + $0x8] sm:$0xf]
        %v371 = vld [vmem:[#allocation5 + $0xc] sm:$0xf]
        %v372 = vld [vmem:[%s238] sm:$0x1]
        %v374 = vlaneseq
        %v375 = vshrl.u32 %v374, 7
        %v376 = vsub.s32 0, %v375
        %v377 = vrot.slane %v372, %v376
        %v507 = vunpack.c.l.b16 %v240
        %v508 = vunpack.c.l.b16 %v241
        %v509 = vunpack.c.l.b16 %v242
        %v510 = vunpack.c.l.b16 %v243
        %v511 = vunpack.c.l.b16 %v244
        %v512 = vunpack.c.l.b16 %v245
        %v513 = vunpack.c.l.b16 %v246
        %v514 = vunpack.c.l.b16 %v247
        %v515 = vunpack.c.l.b16 %v248
        %v516 = vunpack.c.l.b16 %v249
        %v517 = vunpack.c.l.b16 %v250
        %v518 = vunpack.c.l.b16 %v251
        %v519 = vunpack.c.l.b16 %v252
        %v520 = vunpack.c.l.b16 %v253
        %v521 = vunpack.c.l.b16 %v254
        %v522 = vunpack.c.l.b16 %v255
        %v523 = vunpack.c.l.b16 %v256
        %v524 = vunpack.c.l.b16 %v257
        %v525 = vunpack.c.l.b16 %v258
        %v526 = vunpack.c.l.b16 %v259
        %v527 = vunpack.c.l.b16 %v260
        %v528 = vunpack.c.l.b16 %v261
        %v529 = vunpack.c.l.b16 %v262
        %v530 = vunpack.c.l.b16 %v263
        %v531 = vunpack.c.l.b16 %v264
        %v532 = vunpack.c.l.b16 %v265
        %v533 = vunpack.c.l.b16 %v266
        %v534 = vunpack.c.l.b16 %v267
        %v535 = vunpack.c.l.b16 %v268
        %v536 = vunpack.c.l.b16 %v269
        %v537 = vunpack.c.l.b16 %v270
        %v538 = vunpack.c.l.b16 %v271
        %v539 = vunpack.c.l.b16 %v272
        %v540 = vunpack.c.l.b16 %v273
        %v541 = vunpack.c.l.b16 %v274
        %v542 = vunpack.c.l.b16 %v275
        %v543 = vunpack.c.l.b16 %v276
        %v544 = vunpack.c.l.b16 %v277
        %v545 = vunpack.c.l.b16 %v278
        %v546 = vunpack.c.l.b16 %v279
        %v547 = vunpack.c.l.b16 %v280
        %v548 = vunpack.c.l.b16 %v281
        %v549 = vunpack.c.l.b16 %v282
        %v550 = vunpack.c.l.b16 %v283
        %v551 = vunpack.c.l.b16 %v284
        %v552 = vunpack.c.l.b16 %v285
        %v553 = vunpack.c.l.b16 %v286
        %v554 = vunpack.c.l.b16 %v287
        %v555 = vunpack.c.l.b16 %v288
        %v556 = vunpack.c.l.b16 %v289
        %v557 = vunpack.c.l.b16 %v290
        %v558 = vunpack.c.l.b16 %v291
        %v559 = vunpack.c.l.b16 %v292
        %v560 = vunpack.c.l.b16 %v293
        %v561 = vunpack.c.l.b16 %v294
        %v562 = vunpack.c.l.b16 %v295
        %v563 = vunpack.c.l.b16 %v296
        %v564 = vunpack.c.l.b16 %v297
        %v565 = vunpack.c.l.b16 %v298
        %v566 = vunpack.c.l.b16 %v299
        %v567 = vunpack.c.l.b16 %v300
        %v568 = vunpack.c.l.b16 %v301
        %v569 = vunpack.c.l.b16 %v302
        %v570 = vunpack.c.l.b16 %v303
        %v571 = vunpack.c.l.b16 %v304
        %v572 = vunpack.c.l.b16 %v305
        %v573 = vunpack.c.l.b16 %v306
        %v574 = vunpack.c.l.b16 %v307
        %v575 = vunpack.c.l.b16 %v308
        %v576 = vunpack.c.l.b16 %v309
        %v577 = vunpack.c.l.b16 %v310
        %v578 = vunpack.c.l.b16 %v311
        %v579 = vunpack.c.l.b16 %v312
        %v580 = vunpack.c.l.b16 %v313
        %v581 = vunpack.c.l.b16 %v314
        %v582 = vunpack.c.l.b16 %v315
        %v583 = vunpack.c.l.b16 %v316
        %v584 = vunpack.c.l.b16 %v317
        %v585 = vunpack.c.l.b16 %v318
        %v586 = vunpack.c.l.b16 %v319
        %v587 = vunpack.c.l.b16 %v320
        %v588 = vunpack.c.l.b16 %v321
        %v589 = vunpack.c.l.b16 %v322
        %v590 = vunpack.c.l.b16 %v323
        %v591 = vunpack.c.l.b16 %v324
        %v592 = vunpack.c.l.b16 %v325
        %v593 = vunpack.c.l.b16 %v326
        %v594 = vunpack.c.l.b16 %v327
        %v595 = vunpack.c.l.b16 %v328
        %v596 = vunpack.c.l.b16 %v329
        %v597 = vunpack.c.l.b16 %v330
        %v598 = vunpack.c.l.b16 %v331
        %v599 = vunpack.c.l.b16 %v332
        %v600 = vunpack.c.l.b16 %v333
        %v601 = vunpack.c.l.b16 %v334
        %v602 = vunpack.c.l.b16 %v335
        %v603 = vunpack.c.l.b16 %v336
        %v604 = vunpack.c.l.b16 %v337
        %v605 = vunpack.c.l.b16 %v338
        %v606 = vunpack.c.l.b16 %v339
        %v607 = vunpack.c.l.b16 %v340
        %v608 = vunpack.c.l.b16 %v341
        %v609 = vunpack.c.l.b16 %v342
        %v610 = vunpack.c.l.b16 %v343
        %v611 = vunpack.c.l.b16 %v344
        %v612 = vunpack.c.l.b16 %v345
        %v613 = vunpack.c.l.b16 %v346
        %v614 = vunpack.c.l.b16 %v347
        %v615 = vunpack.c.l.b16 %v348
        %v616 = vunpack.c.l.b16 %v349
        %v617 = vunpack.c.l.b16 %v350
        %v618 = vunpack.c.l.b16 %v351
        %v619 = vunpack.c.l.b16 %v352
        %v620 = vunpack.c.l.b16 %v353
        %v621 = vunpack.c.l.b16 %v354
        %v622 = vunpack.c.l.b16 %v355
        %v623 = vunpack.c.l.b16 %v356
        %v624 = vunpack.c.l.b16 %v357
        %v625 = vunpack.c.l.b16 %v358
        %v626 = vunpack.c.l.b16 %v359
        %v627 = vunpack.c.l.b16 %v360
        %v628 = vunpack.c.l.b16 %v361
        %v629 = vunpack.c.l.b16 %v362
        %v630 = vunpack.c.l.b16 %v363
        %v631 = vunpack.c.l.b16 %v364
        %v632 = vunpack.c.l.b16 %v365
        %v633 = vunpack.c.l.b16 %v366
        %v634 = vunpack.c.l.b16 %v367
        %v635 = vpack.c.b16 %v508, %v507
        %v636 = vpack.c.b16 %v510, %v509
        %v637 = vpack.c.b16 %v512, %v511
        %v638 = vpack.c.b16 %v514, %v513
        %v639 = vpack.c.b16 %v516, %v515
        %v640 = vpack.c.b16 %v518, %v517
        %v641 = vpack.c.b16 %v520, %v519
        %v642 = vpack.c.b16 %v522, %v521
        %v643 = vpack.c.b16 %v524, %v523
        %v644 = vpack.c.b16 %v526, %v525
        %v645 = vpack.c.b16 %v528, %v527
        %v646 = vpack.c.b16 %v530, %v529
        %v647 = vpack.c.b16 %v532, %v531
        %v648 = vpack.c.b16 %v534, %v533
        %v649 = vpack.c.b16 %v536, %v535
        %v650 = vpack.c.b16 %v538, %v537
        %v651 = vpack.c.b16 %v540, %v539
        %v652 = vpack.c.b16 %v542, %v541
        %v653 = vpack.c.b16 %v544, %v543
        %v654 = vpack.c.b16 %v546, %v545
        %v655 = vpack.c.b16 %v548, %v547
        %v656 = vpack.c.b16 %v550, %v549
        %v657 = vpack.c.b16 %v552, %v551
        %v658 = vpack.c.b16 %v554, %v553
        %v659 = vpack.c.b16 %v556, %v555
        %v660 = vpack.c.b16 %v558, %v557
        %v661 = vpack.c.b16 %v560, %v559
        %v662 = vpack.c.b16 %v562, %v561
        %v663 = vpack.c.b16 %v564, %v563
        %v664 = vpack.c.b16 %v566, %v565
        %v665 = vpack.c.b16 %v568, %v567
        %v666 = vpack.c.b16 %v570, %v569
        %v667 = vpack.c.b16 %v572, %v571
        %v668 = vpack.c.b16 %v574, %v573
        %v669 = vpack.c.b16 %v576, %v575
        %v670 = vpack.c.b16 %v578, %v577
        %v671 = vpack.c.b16 %v580, %v579
        %v672 = vpack.c.b16 %v582, %v581
        %v673 = vpack.c.b16 %v584, %v583
        %v674 = vpack.c.b16 %v586, %v585
        %v675 = vpack.c.b16 %v588, %v587
        %v676 = vpack.c.b16 %v590, %v589
        %v677 = vpack.c.b16 %v592, %v591
        %v678 = vpack.c.b16 %v594, %v593
        %v679 = vpack.c.b16 %v596, %v595
        %v680 = vpack.c.b16 %v598, %v597
        %v681 = vpack.c.b16 %v600, %v599
        %v682 = vpack.c.b16 %v602, %v601
        %v683 = vpack.c.b16 %v604, %v603
        %v684 = vpack.c.b16 %v606, %v605
        %v685 = vpack.c.b16 %v608, %v607
        %v686 = vpack.c.b16 %v610, %v609
        %v687 = vpack.c.b16 %v612, %v611
        %v688 = vpack.c.b16 %v614, %v613
        %v689 = vpack.c.b16 %v616, %v615
        %v690 = vpack.c.b16 %v618, %v617
        %v691 = vpack.c.b16 %v620, %v619
        %v692 = vpack.c.b16 %v622, %v621
        %v693 = vpack.c.b16 %v624, %v623
        %v694 = vpack.c.b16 %v626, %v625
        %v695 = vpack.c.b16 %v628, %v627
        %v696 = vpack.c.b16 %v630, %v629
        %v697 = vpack.c.b16 %v632, %v631
        %v698 = vpack.c.b16 %v634, %v633
        %v703 = vunpack.c.l.b16 %v368
        %v704 = vunpack.c.l.b16 %v369
        %v705 = vunpack.c.l.b16 %v370
        %v706 = vunpack.c.l.b16 %v371
        %v707 = vpack.c.b16 %v704, %v703
        %v708 = vpack.c.b16 %v706, %v705
        %vm711 = vcmask 261120
        %v713 = vsel %vm711, %v635, 0
        %v716 = vsel %vm711, %v636, 0
        %v719 = vsel %vm711, %v637, 0
        %v722 = vsel %vm711, %v638, 0
        %v725 = vsel %vm711, %v639, 0
        %v728 = vsel %vm711, %v640, 0
        %v731 = vsel %vm711, %v641, 0
        %v734 = vsel %vm711, %v642, 0
        %v737 = vsel %vm711, %v643, 0
        %v740 = vsel %vm711, %v644, 0
        %v743 = vsel %vm711, %v645, 0
        %v746 = vsel %vm711, %v646, 0
        %v749 = vsel %vm711, %v647, 0
        %v752 = vsel %vm711, %v648, 0
        %v755 = vsel %vm711, %v649, 0
        %v758 = vsel %vm711, %v650, 0
        %v761 = vsel %vm711, %v651, 0
        %v764 = vsel %vm711, %v652, 0
        %v767 = vsel %vm711, %v653, 0
        %v770 = vsel %vm711, %v654, 0
        %v773 = vsel %vm711, %v655, 0
        %v776 = vsel %vm711, %v656, 0
        %v779 = vsel %vm711, %v657, 0
        %v782 = vsel %vm711, %v658, 0
        %v785 = vsel %vm711, %v659, 0
        %v788 = vsel %vm711, %v660, 0
        %v791 = vsel %vm711, %v661, 0
        %v794 = vsel %vm711, %v662, 0
        %v797 = vsel %vm711, %v663, 0
        %v800 = vsel %vm711, %v664, 0
        %v803 = vsel %vm711, %v665, 0
        %v806 = vsel %vm711, %v666, 0
        %v809 = vsel %vm711, %v667, 0
        %v812 = vsel %vm711, %v668, 0
        %v815 = vsel %vm711, %v669, 0
        %v818 = vsel %vm711, %v670, 0
        %v821 = vsel %vm711, %v671, 0
        %v824 = vsel %vm711, %v672, 0
        %v827 = vsel %vm711, %v673, 0
        %v830 = vsel %vm711, %v674, 0
        %v833 = vsel %vm711, %v675, 0
        %v836 = vsel %vm711, %v676, 0
        %v839 = vsel %vm711, %v677, 0
        %v842 = vsel %vm711, %v678, 0
        %v845 = vsel %vm711, %v679, 0
        %v848 = vsel %vm711, %v680, 0
        %v851 = vsel %vm711, %v681, 0
        %v854 = vsel %vm711, %v682, 0
        %v857 = vsel %vm711, %v683, 0
        %v860 = vsel %vm711, %v684, 0
        %v863 = vsel %vm711, %v685, 0
        %v866 = vsel %vm711, %v686, 0
        %v869 = vsel %vm711, %v687, 0
        %v872 = vsel %vm711, %v688, 0
        %v875 = vsel %vm711, %v689, 0
        %v878 = vsel %vm711, %v690, 0
        %v881 = vsel %vm711, %v691, 0
        %v884 = vsel %vm711, %v692, 0
        %v887 = vsel %vm711, %v693, 0
        %v890 = vsel %vm711, %v694, 0
        %v893 = vsel %vm711, %v695, 0
        %v896 = vsel %vm711, %v696, 0
        %v899 = vsel %vm711, %v697, 0
        %v902 = vsel %vm711, %v698, 0
        %904 = vmatprep.subr.bf16.mxu0 0
        %905 = vmatpush1.bf16.msra.mxu0 %v707
        %906 = vmatprep.subr.bf16.mxu0 0
        %907 = vmatpush1.bf16.msra.mxu0 %v708
        %908 = vmatprep.subr.bf16.mxu0 0
        %909 = vmatpush1.bf16.msra.mxu0 0
        %910 = vmatprep.subr.bf16.mxu0 0
        %911 = vmatpush1.bf16.msra.mxu0 0
        %912 = vmatprep.subr.bf16.mxu0 0
        %913 = vmatpush1.bf16.msra.mxu0 0
        %914 = vmatprep.subr.bf16.mxu0 0
        %915 = vmatpush1.bf16.msra.mxu0 0
        %916 = vmatprep.subr.bf16.mxu0 0
        %917 = vmatpush1.bf16.msra.mxu0 0
        %918 = vmatprep.subr.bf16.mxu0 0
        %919 = vmatpush1.bf16.msra.mxu0 0
        %920 = vmatprep.subr.bf16.mxu0 0
        %921 = vmatpush1.bf16.msra.mxu0 0
        %922 = vmatprep.subr.bf16.mxu0 0
        %923 = vmatpush1.bf16.msra.mxu0 0
        %924 = vmatprep.subr.bf16.mxu0 0
        %925 = vmatpush1.bf16.msra.mxu0 0
        %926 = vmatprep.subr.bf16.mxu0 0
        %927 = vmatpush1.bf16.msra.mxu0 0
        %928 = vmatprep.subr.bf16.mxu0 0
        %929 = vmatpush1.bf16.msra.mxu0 0
        %930 = vmatprep.subr.bf16.mxu0 0
        %931 = vmatpush1.bf16.msra.mxu0 0
        %932 = vmatprep.subr.bf16.mxu0 0
        %933 = vmatpush1.bf16.msra.mxu0 0
        %934 = vmatprep.subr.bf16.mxu0 0
        %935 = vmatpush1.bf16.msra.mxu0 0
        %936 = vmatprep.mubr.bf16.mxu0 0
        %937 = vmatmul.mubr.bf16.gmra.mrb[0].mxu0 %v713
        %v938 = vpop.f32.mrb[0].mxu0
        %v939 = vadd.f32 %v377, %v938
        %v940 = vpop.f32.mrb[0].mxu0
        %v941 = vpop.f32.mrb[0].mxu0
        %v942 = vadd.f32 %v377, %v941
        %v943 = vpop.f32.mrb[0].mxu0
        %944 = vmatprep.mubr.bf16.mxu0 0
        %945 = vmatmul.mubr.bf16.gmra.mrb[0].mxu0 %v716
        %v946 = vpop.f32.mrb[0].mxu0
        %v947 = vadd.f32 %v377, %v946
        %v948 = vpop.f32.mrb[0].mxu0
        %v949 = vpop.f32.mrb[0].mxu0
        %v950 = vadd.f32 %v377, %v949
        %v951 = vpop.f32.mrb[0].mxu0
        %952 = vmatprep.mubr.bf16.mxu0 0
        %953 = vmatmul.mubr.bf16.gmra.mrb[0].mxu0 %v719
        %v954 = vpop.f32.mrb[0].mxu0
        %v955 = vadd.f32 %v377, %v954
        %v956 = vpop.f32.mrb[0].mxu0
        %v957 = vpop.f32.mrb[0].mxu0
        %v958 = vadd.f32 %v377, %v957
        %v959 = vpop.f32.mrb[0].mxu0
        %960 = vmatprep.mubr.bf16.mxu0 0
        %961 = vmatmul.mubr.bf16.gmra.mrb[0].mxu0 %v722
        %v962 = vpop.f32.mrb[0].mxu0
        %v963 = vadd.f32 %v377, %v962
        %v964 = vpop.f32.mrb[0].mxu0
        %v965 = vpop.f32.mrb[0].mxu0
        %v966 = vadd.f32 %v377, %v965
        %v967 = vpop.f32.mrb[0].mxu0
        %968 = vmatprep.mubr.bf16.mxu0 0
        %969 = vmatmul.mubr.bf16.gmra.mrb[0].mxu0 %v725
        %v970 = vpop.f32.mrb[0].mxu0
        %v971 = vadd.f32 %v377, %v970
        %v972 = vpop.f32.mrb[0].mxu0
        %v973 = vpop.f32.mrb[0].mxu0
        %v974 = vadd.f32 %v377, %v973
        %v975 = vpop.f32.mrb[0].mxu0
        %976 = vmatprep.mubr.bf16.mxu0 0
        %977 = vmatmul.mubr.bf16.gmra.mrb[0].mxu0 %v728
        %v978 = vpop.f32.mrb[0].mxu0
        %v979 = vadd.f32 %v377, %v978
        %v980 = vpop.f32.mrb[0].mxu0
        %v981 = vpop.f32.mrb[0].mxu0
        %v982 = vadd.f32 %v377, %v981
        %v983 = vpop.f32.mrb[0].mxu0
        %984 = vmatprep.mubr.bf16.mxu0 0
        %985 = vmatmul.mubr.bf16.gmra.mrb[0].mxu0 %v731
        %v986 = vpop.f32.mrb[0].mxu0
        %v987 = vadd.f32 %v377, %v986
        %v988 = vpop.f32.mrb[0].mxu0
        %v989 = vpop.f32.mrb[0].mxu0
        %v990 = vadd.f32 %v377, %v989
        %v991 = vpop.f32.mrb[0].mxu0
        %992 = vmatprep.mubr.bf16.mxu0 0
        %993 = vmatmul.mubr.bf16.gmra.mrb[0].mxu0 %v734
        %v994 = vpop.f32.mrb[0].mxu0
        %v995 = vadd.f32 %v377, %v994
        %v996 = vpop.f32.mrb[0].mxu0
        %v997 = vpop.f32.mrb[0].mxu0
        %v998 = vadd.f32 %v377, %v997
        %v999 = vpop.f32.mrb[0].mxu0
        %1000 = vmatprep.mubr.bf16.mxu0 0
        %1001 = vmatmul.mubr.bf16.gmra.mrb[0].mxu0 %v737
        %v1002 = vpop.f32.mrb[0].mxu0
        %v1003 = vadd.f32 %v377, %v1002
        %v1004 = vpop.f32.mrb[0].mxu0
        %v1005 = vpop.f32.mrb[0].mxu0
        %v1006 = vadd.f32 %v377, %v1005
        %v1007 = vpop.f32.mrb[0].mxu0
        %1008 = vmatprep.mubr.bf16.mxu0 0
        %1009 = vmatmul.mubr.bf16.gmra.mrb[0].mxu0 %v740
        %v1010 = vpop.f32.mrb[0].mxu0
        %v1011 = vadd.f32 %v377, %v1010
        %v1012 = vpop.f32.mrb[0].mxu0
        %v1013 = vpop.f32.mrb[0].mxu0
        %v1014 = vadd.f32 %v377, %v1013
        %v1015 = vpop.f32.mrb[0].mxu0
        %1016 = vmatprep.mubr.bf16.mxu0 0
        %1017 = vmatmul.mubr.bf16.gmra.mrb[0].mxu0 %v743
        %v1018 = vpop.f32.mrb[0].mxu0
        %v1019 = vadd.f32 %v377, %v1018
        %v1020 = vpop.f32.mrb[0].mxu0
        %v1021 = vpop.f32.mrb[0].mxu0
        %v1022 = vadd.f32 %v377, %v1021
        %v1023 = vpop.f32.mrb[0].mxu0
        %1024 = vmatprep.mubr.bf16.mxu0 0
        %1025 = vmatmul.mubr.bf16.gmra.mrb[0].mxu0 %v746
        %v1026 = vpop.f32.mrb[0].mxu0
        %v1027 = vadd.f32 %v377, %v1026
        %v1028 = vpop.f32.mrb[0].mxu0
        %v1029 = vpop.f32.mrb[0].mxu0
        %v1030 = vadd.f32 %v377, %v1029
        %v1031 = vpop.f32.mrb[0].mxu0
        %1032 = vmatprep.mubr.bf16.mxu0 0
        %1033 = vmatmul.mubr.bf16.gmra.mrb[0].mxu0 %v749
        %v1034 = vpop.f32.mrb[0].mxu0
        %v1035 = vadd.f32 %v377, %v1034
        %v1036 = vpop.f32.mrb[0].mxu0
        %v1037 = vpop.f32.mrb[0].mxu0
        %v1038 = vadd.f32 %v377, %v1037
        %v1039 = vpop.f32.mrb[0].mxu0
        %1040 = vmatprep.mubr.bf16.mxu0 0
        %1041 = vmatmul.mubr.bf16.gmra.mrb[0].mxu0 %v752
        %v1042 = vpop.f32.mrb[0].mxu0
        %v1043 = vadd.f32 %v377, %v1042
        %v1044 = vpop.f32.mrb[0].mxu0
        %v1045 = vpop.f32.mrb[0].mxu0
        %v1046 = vadd.f32 %v377, %v1045
        %v1047 = vpop.f32.mrb[0].mxu0
        %1048 = vmatprep.mubr.bf16.mxu0 0
        %1049 = vmatmul.mubr.bf16.gmra.mrb[0].mxu0 %v755
        %v1050 = vpop.f32.mrb[0].mxu0
        %v1051 = vadd.f32 %v377, %v1050
        %v1052 = vpop.f32.mrb[0].mxu0
        %v1053 = vpop.f32.mrb[0].mxu0
        %v1054 = vadd.f32 %v377, %v1053
        %v1055 = vpop.f32.mrb[0].mxu0
        %1056 = vmatprep.mubr.bf16.mxu0 0
        %1057 = vmatmul.mubr.bf16.gmra.mrb[0].mxu0 %v758
        %v1058 = vpop.f32.mrb[0].mxu0
        %v1059 = vadd.f32 %v377, %v1058
        %v1060 = vpop.f32.mrb[0].mxu0
        %v1061 = vpop.f32.mrb[0].mxu0
        %v1062 = vadd.f32 %v377, %v1061
        %v1063 = vpop.f32.mrb[0].mxu0
        %1064 = vmatprep.mubr.bf16.mxu0 0
        %1065 = vmatmul.mubr.bf16.gmra.mrb[0].mxu0 %v761
        %v1066 = vpop.f32.mrb[0].mxu0
        %v1067 = vadd.f32 %v377, %v1066
        %v1068 = vpop.f32.mrb[0].mxu0
        %v1069 = vpop.f32.mrb[0].mxu0
        %v1070 = vadd.f32 %v377, %v1069
        %v1071 = vpop.f32.mrb[0].mxu0
        %1072 = vmatprep.mubr.bf16.mxu0 0
        %1073 = vmatmul.mubr.bf16.gmra.mrb[0].mxu0 %v764
        %v1074 = vpop.f32.mrb[0].mxu0
        %v1075 = vadd.f32 %v377, %v1074
        %v1076 = vpop.f32.mrb[0].mxu0
        %v1077 = vpop.f32.mrb[0].mxu0
        %v1078 = vadd.f32 %v377, %v1077
        %v1079 = vpop.f32.mrb[0].mxu0
        %1080 = vmatprep.mubr.bf16.mxu0 0
        %1081 = vmatmul.mubr.bf16.gmra.mrb[0].mxu0 %v767
        %v1082 = vpop.f32.mrb[0].mxu0
        %v1083 = vadd.f32 %v377, %v1082
        %v1084 = vpop.f32.mrb[0].mxu0
        %v1085 = vpop.f32.mrb[0].mxu0
        %v1086 = vadd.f32 %v377, %v1085
        %v1087 = vpop.f32.mrb[0].mxu0
        %1088 = vmatprep.mubr.bf16.mxu0 0
        %1089 = vmatmul.mubr.bf16.gmra.mrb[0].mxu0 %v770
        %v1090 = vpop.f32.mrb[0].mxu0
        %v1091 = vadd.f32 %v377, %v1090
        %v1092 = vpop.f32.mrb[0].mxu0
        %v1093 = vpop.f32.mrb[0].mxu0
        %v1094 = vadd.f32 %v377, %v1093
        %v1095 = vpop.f32.mrb[0].mxu0
        %1096 = vmatprep.mubr.bf16.mxu0 0
        %1097 = vmatmul.mubr.bf16.gmra.mrb[0].mxu0 %v773
        %v1098 = vpop.f32.mrb[0].mxu0
        %v1099 = vadd.f32 %v377, %v1098
        %v1100 = vpop.f32.mrb[0].mxu0
        %v1101 = vpop.f32.mrb[0].mxu0
        %v1102 = vadd.f32 %v377, %v1101
        %v1103 = vpop.f32.mrb[0].mxu0
        %1104 = vmatprep.mubr.bf16.mxu0 0
        %1105 = vmatmul.mubr.bf16.gmra.mrb[0].mxu0 %v776
        %v1106 = vpop.f32.mrb[0].mxu0
        %v1107 = vadd.f32 %v377, %v1106
        %v1108 = vpop.f32.mrb[0].mxu0
        %v1109 = vpop.f32.mrb[0].mxu0
        %v1110 = vadd.f32 %v377, %v1109
        %v1111 = vpop.f32.mrb[0].mxu0
        %1112 = vmatprep.mubr.bf16.mxu0 0
        %1113 = vmatmul.mubr.bf16.gmra.mrb[0].mxu0 %v779
        %v1114 = vpop.f32.mrb[0].mxu0
        %v1115 = vadd.f32 %v377, %v1114
        %v1116 = vpop.f32.mrb[0].mxu0
        %v1117 = vpop.f32.mrb[0].mxu0
        %v1118 = vadd.f32 %v377, %v1117
        %v1119 = vpop.f32.mrb[0].mxu0
        %1120 = vmatprep.mubr.bf16.mxu0 0
        %1121 = vmatmul.mubr.bf16.gmra.mrb[0].mxu0 %v782
        %v1122 = vpop.f32.mrb[0].mxu0
        %v1123 = vadd.f32 %v377, %v1122
        %v1124 = vpop.f32.mrb[0].mxu0
        %v1125 = vpop.f32.mrb[0].mxu0
        %v1126 = vadd.f32 %v377, %v1125
        %v1127 = vpop.f32.mrb[0].mxu0
        %1128 = vmatprep.mubr.bf16.mxu0 0
        %1129 = vmatmul.mubr.bf16.gmra.mrb[0].mxu0 %v785
        %v1130 = vpop.f32.mrb[0].mxu0
        %v1131 = vadd.f32 %v377, %v1130
        %v1132 = vpop.f32.mrb[0].mxu0
        %v1133 = vpop.f32.mrb[0].mxu0
        %v1134 = vadd.f32 %v377, %v1133
        %v1135 = vpop.f32.mrb[0].mxu0
        %1136 = vmatprep.mubr.bf16.mxu0 0
        %1137 = vmatmul.mubr.bf16.gmra.mrb[0].mxu0 %v788
        %v1138 = vpop.f32.mrb[0].mxu0
        %v1139 = vadd.f32 %v377, %v1138
        %v1140 = vpop.f32.mrb[0].mxu0
        %v1141 = vpop.f32.mrb[0].mxu0
        %v1142 = vadd.f32 %v377, %v1141
        %v1143 = vpop.f32.mrb[0].mxu0
        %1144 = vmatprep.mubr.bf16.mxu0 0
        %1145 = vmatmul.mubr.bf16.gmra.mrb[0].mxu0 %v791
        %v1146 = vpop.f32.mrb[0].mxu0
        %v1147 = vadd.f32 %v377, %v1146
        %v1148 = vpop.f32.mrb[0].mxu0
        %v1149 = vpop.f32.mrb[0].mxu0
        %v1150 = vadd.f32 %v377, %v1149
        %v1151 = vpop.f32.mrb[0].mxu0
        %1152 = vmatprep.mubr.bf16.mxu0 0
        %1153 = vmatmul.mubr.bf16.gmra.mrb[0].mxu0 %v794
        %v1154 = vpop.f32.mrb[0].mxu0
        %v1155 = vadd.f32 %v377, %v1154
        %v1156 = vpop.f32.mrb[0].mxu0
        %v1157 = vpop.f32.mrb[0].mxu0
        %v1158 = vadd.f32 %v377, %v1157
        %v1159 = vpop.f32.mrb[0].mxu0
        %1160 = vmatprep.mubr.bf16.mxu0 0
        %1161 = vmatmul.mubr.bf16.gmra.mrb[0].mxu0 %v797
        %v1162 = vpop.f32.mrb[0].mxu0
        %v1163 = vadd.f32 %v377, %v1162
        %v1164 = vpop.f32.mrb[0].mxu0
        %v1165 = vpop.f32.mrb[0].mxu0
        %v1166 = vadd.f32 %v377, %v1165
        %v1167 = vpop.f32.mrb[0].mxu0
        %1168 = vmatprep.mubr.bf16.mxu0 0
        %1169 = vmatmul.mubr.bf16.gmra.mrb[0].mxu0 %v800
        %v1170 = vpop.f32.mrb[0].mxu0
        %v1171 = vadd.f32 %v377, %v1170
        %v1172 = vpop.f32.mrb[0].mxu0
        %v1173 = vpop.f32.mrb[0].mxu0
        %v1174 = vadd.f32 %v377, %v1173
        %v1175 = vpop.f32.mrb[0].mxu0
        %1176 = vmatprep.mubr.bf16.mxu0 0
        %1177 = vmatmul.mubr.bf16.gmra.mrb[0].mxu0 %v803
        %v1178 = vpop.f32.mrb[0].mxu0
        %v1179 = vadd.f32 %v377, %v1178
        %v1180 = vpop.f32.mrb[0].mxu0
        %v1181 = vpop.f32.mrb[0].mxu0
        %v1182 = vadd.f32 %v377, %v1181
        %v1183 = vpop.f32.mrb[0].mxu0
        %1184 = vmatprep.mubr.bf16.mxu0 0
        %1185 = vmatmul.mubr.bf16.gmra.mrb[0].mxu0 %v806
        %v1186 = vpop.f32.mrb[0].mxu0
        %v1187 = vadd.f32 %v377, %v1186
        %v1188 = vpop.f32.mrb[0].mxu0
        %v1189 = vpop.f32.mrb[0].mxu0
        %v1190 = vadd.f32 %v377, %v1189
        %v1191 = vpop.f32.mrb[0].mxu0
        %1192 = vmatprep.mubr.bf16.mxu0 0
        %1193 = vmatmul.mubr.bf16.gmra.mrb[0].mxu0 %v809
        %v1194 = vpop.f32.mrb[0].mxu0
        %v1195 = vadd.f32 %v377, %v1194
        %v1196 = vpop.f32.mrb[0].mxu0
        %v1197 = vpop.f32.mrb[0].mxu0
        %v1198 = vadd.f32 %v377, %v1197
        %v1199 = vpop.f32.mrb[0].mxu0
        %1200 = vmatprep.mubr.bf16.mxu0 0
        %1201 = vmatmul.mubr.bf16.gmra.mrb[0].mxu0 %v812
        %v1202 = vpop.f32.mrb[0].mxu0
        %v1203 = vadd.f32 %v377, %v1202
        %v1204 = vpop.f32.mrb[0].mxu0
        %v1205 = vpop.f32.mrb[0].mxu0
        %v1206 = vadd.f32 %v377, %v1205
        %v1207 = vpop.f32.mrb[0].mxu0
        %1208 = vmatprep.mubr.bf16.mxu0 0
        %1209 = vmatmul.mubr.bf16.gmra.mrb[0].mxu0 %v815
        %v1210 = vpop.f32.mrb[0].mxu0
        %v1211 = vadd.f32 %v377, %v1210
        %v1212 = vpop.f32.mrb[0].mxu0
        %v1213 = vpop.f32.mrb[0].mxu0
        %v1214 = vadd.f32 %v377, %v1213
        %v1215 = vpop.f32.mrb[0].mxu0
        %1216 = vmatprep.mubr.bf16.mxu0 0
        %1217 = vmatmul.mubr.bf16.gmra.mrb[0].mxu0 %v818
        %v1218 = vpop.f32.mrb[0].mxu0
        %v1219 = vadd.f32 %v377, %v1218
        %v1220 = vpop.f32.mrb[0].mxu0
        %v1221 = vpop.f32.mrb[0].mxu0
        %v1222 = vadd.f32 %v377, %v1221
        %v1223 = vpop.f32.mrb[0].mxu0
        %1224 = vmatprep.mubr.bf16.mxu0 0
        %1225 = vmatmul.mubr.bf16.gmra.mrb[0].mxu0 %v821
        %v1226 = vpop.f32.mrb[0].mxu0
        %v1227 = vadd.f32 %v377, %v1226
        %v1228 = vpop.f32.mrb[0].mxu0
        %v1229 = vpop.f32.mrb[0].mxu0
        %v1230 = vadd.f32 %v377, %v1229
        %v1231 = vpop.f32.mrb[0].mxu0
        %1232 = vmatprep.mubr.bf16.mxu0 0
        %1233 = vmatmul.mubr.bf16.gmra.mrb[0].mxu0 %v824
        %v1234 = vpop.f32.mrb[0].mxu0
        %v1235 = vadd.f32 %v377, %v1234
        %v1236 = vpop.f32.mrb[0].mxu0
        %v1237 = vpop.f32.mrb[0].mxu0
        %v1238 = vadd.f32 %v377, %v1237
        %v1239 = vpop.f32.mrb[0].mxu0
        %1240 = vmatprep.mubr.bf16.mxu0 0
        %1241 = vmatmul.mubr.bf16.gmra.mrb[0].mxu0 %v827
        %v1242 = vpop.f32.mrb[0].mxu0
        %v1243 = vadd.f32 %v377, %v1242
        %v1244 = vpop.f32.mrb[0].mxu0
        %v1245 = vpop.f32.mrb[0].mxu0
        %v1246 = vadd.f32 %v377, %v1245
        %v1247 = vpop.f32.mrb[0].mxu0
        %1248 = vmatprep.mubr.bf16.mxu0 0
        %1249 = vmatmul.mubr.bf16.gmra.mrb[0].mxu0 %v830
        %v1250 = vpop.f32.mrb[0].mxu0
        %v1251 = vadd.f32 %v377, %v1250
        %v1252 = vpop.f32.mrb[0].mxu0
        %v1253 = vpop.f32.mrb[0].mxu0
        %v1254 = vadd.f32 %v377, %v1253
        %v1255 = vpop.f32.mrb[0].mxu0
        %1256 = vmatprep.mubr.bf16.mxu0 0
        %1257 = vmatmul.mubr.bf16.gmra.mrb[0].mxu0 %v833
        %v1258 = vpop.f32.mrb[0].mxu0
        %v1259 = vadd.f32 %v377, %v1258
        %v1260 = vpop.f32.mrb[0].mxu0
        %v1261 = vpop.f32.mrb[0].mxu0
        %v1262 = vadd.f32 %v377, %v1261
        %v1263 = vpop.f32.mrb[0].mxu0
        %1264 = vmatprep.mubr.bf16.mxu0 0
        %1265 = vmatmul.mubr.bf16.gmra.mrb[0].mxu0 %v836
        %v1266 = vpop.f32.mrb[0].mxu0
        %v1267 = vadd.f32 %v377, %v1266
        %v1268 = vpop.f32.mrb[0].mxu0
        %v1269 = vpop.f32.mrb[0].mxu0
        %v1270 = vadd.f32 %v377, %v1269
        %v1271 = vpop.f32.mrb[0].mxu0
        %1272 = vmatprep.mubr.bf16.mxu0 0
        %1273 = vmatmul.mubr.bf16.gmra.mrb[0].mxu0 %v839
        %v1274 = vpop.f32.mrb[0].mxu0
        %v1275 = vadd.f32 %v377, %v1274
        %v1276 = vpop.f32.mrb[0].mxu0
        %v1277 = vpop.f32.mrb[0].mxu0
        %v1278 = vadd.f32 %v377, %v1277
        %v1279 = vpop.f32.mrb[0].mxu0
        %1280 = vmatprep.mubr.bf16.mxu0 0
        %1281 = vmatmul.mubr.bf16.gmra.mrb[0].mxu0 %v842
        %v1282 = vpop.f32.mrb[0].mxu0
        %v1283 = vadd.f32 %v377, %v1282
        %v1284 = vpop.f32.mrb[0].mxu0
        %v1285 = vpop.f32.mrb[0].mxu0
        %v1286 = vadd.f32 %v377, %v1285
        %v1287 = vpop.f32.mrb[0].mxu0
        %1288 = vmatprep.mubr.bf16.mxu0 0
        %1289 = vmatmul.mubr.bf16.gmra.mrb[0].mxu0 %v845
        %v1290 = vpop.f32.mrb[0].mxu0
        %v1291 = vadd.f32 %v377, %v1290
        %v1292 = vpop.f32.mrb[0].mxu0
        %v1293 = vpop.f32.mrb[0].mxu0
        %v1294 = vadd.f32 %v377, %v1293
        %v1295 = vpop.f32.mrb[0].mxu0
        %1296 = vmatprep.mubr.bf16.mxu0 0
        %1297 = vmatmul.mubr.bf16.gmra.mrb[0].mxu0 %v848
        %v1298 = vpop.f32.mrb[0].mxu0
        %v1299 = vadd.f32 %v377, %v1298
        %v1300 = vpop.f32.mrb[0].mxu0
        %v1301 = vpop.f32.mrb[0].mxu0
        %v1302 = vadd.f32 %v377, %v1301
        %v1303 = vpop.f32.mrb[0].mxu0
        %1304 = vmatprep.mubr.bf16.mxu0 0
        %1305 = vmatmul.mubr.bf16.gmra.mrb[0].mxu0 %v851
        %v1306 = vpop.f32.mrb[0].mxu0
        %v1307 = vadd.f32 %v377, %v1306
        %v1308 = vpop.f32.mrb[0].mxu0
        %v1309 = vpop.f32.mrb[0].mxu0
        %v1310 = vadd.f32 %v377, %v1309
        %v1311 = vpop.f32.mrb[0].mxu0
        %1312 = vmatprep.mubr.bf16.mxu0 0
        %1313 = vmatmul.mubr.bf16.gmra.mrb[0].mxu0 %v854
        %v1314 = vpop.f32.mrb[0].mxu0
        %v1315 = vadd.f32 %v377, %v1314
        %v1316 = vpop.f32.mrb[0].mxu0
        %v1317 = vpop.f32.mrb[0].mxu0
        %v1318 = vadd.f32 %v377, %v1317
        %v1319 = vpop.f32.mrb[0].mxu0
        %1320 = vmatprep.mubr.bf16.mxu0 0
        %1321 = vmatmul.mubr.bf16.gmra.mrb[0].mxu0 %v857
        %v1322 = vpop.f32.mrb[0].mxu0
        %v1323 = vadd.f32 %v377, %v1322
        %v1324 = vpop.f32.mrb[0].mxu0
        %v1325 = vpop.f32.mrb[0].mxu0
        %v1326 = vadd.f32 %v377, %v1325
        %v1327 = vpop.f32.mrb[0].mxu0
        %1328 = vmatprep.mubr.bf16.mxu0 0
        %1329 = vmatmul.mubr.bf16.gmra.mrb[0].mxu0 %v860
        %v1330 = vpop.f32.mrb[0].mxu0
        %v1331 = vadd.f32 %v377, %v1330
        %v1332 = vpop.f32.mrb[0].mxu0
        %v1333 = vpop.f32.mrb[0].mxu0
        %v1334 = vadd.f32 %v377, %v1333
        %v1335 = vpop.f32.mrb[0].mxu0
        %1336 = vmatprep.mubr.bf16.mxu0 0
        %1337 = vmatmul.mubr.bf16.gmra.mrb[0].mxu0 %v863
        %v1338 = vpop.f32.mrb[0].mxu0
        %v1339 = vadd.f32 %v377, %v1338
        %v1340 = vpop.f32.mrb[0].mxu0
        %v1341 = vpop.f32.mrb[0].mxu0
        %v1342 = vadd.f32 %v377, %v1341
        %v1343 = vpop.f32.mrb[0].mxu0
        %1344 = vmatprep.mubr.bf16.mxu0 0
        %1345 = vmatmul.mubr.bf16.gmra.mrb[0].mxu0 %v866
        %v1346 = vpop.f32.mrb[0].mxu0
        %v1347 = vadd.f32 %v377, %v1346
        %v1348 = vpop.f32.mrb[0].mxu0
        %v1349 = vpop.f32.mrb[0].mxu0
        %v1350 = vadd.f32 %v377, %v1349
        %v1351 = vpop.f32.mrb[0].mxu0
        %1352 = vmatprep.mubr.bf16.mxu0 0
        %1353 = vmatmul.mubr.bf16.gmra.mrb[0].mxu0 %v869
        %v1354 = vpop.f32.mrb[0].mxu0
        %v1355 = vadd.f32 %v377, %v1354
        %v1356 = vpop.f32.mrb[0].mxu0
        %v1357 = vpop.f32.mrb[0].mxu0
        %v1358 = vadd.f32 %v377, %v1357
        %v1359 = vpop.f32.mrb[0].mxu0
        %1360 = vmatprep.mubr.bf16.mxu0 0
        %1361 = vmatmul.mubr.bf16.gmra.mrb[0].mxu0 %v872
        %v1362 = vpop.f32.mrb[0].mxu0
        %v1363 = vadd.f32 %v377, %v1362
        %v1364 = vpop.f32.mrb[0].mxu0
        %v1365 = vpop.f32.mrb[0].mxu0
        %v1366 = vadd.f32 %v377, %v1365
        %v1367 = vpop.f32.mrb[0].mxu0
        %1368 = vmatprep.mubr.bf16.mxu0 0
        %1369 = vmatmul.mubr.bf16.gmra.mrb[0].mxu0 %v875
        %v1370 = vpop.f32.mrb[0].mxu0
        %v1371 = vadd.f32 %v377, %v1370
        %v1372 = vpop.f32.mrb[0].mxu0
        %v1373 = vpop.f32.mrb[0].mxu0
        %v1374 = vadd.f32 %v377, %v1373
        %v1375 = vpop.f32.mrb[0].mxu0
        %1376 = vmatprep.mubr.bf16.mxu0 0
        %1377 = vmatmul.mubr.bf16.gmra.mrb[0].mxu0 %v878
        %v1378 = vpop.f32.mrb[0].mxu0
        %v1379 = vadd.f32 %v377, %v1378
        %v1380 = vpop.f32.mrb[0].mxu0
        %v1381 = vpop.f32.mrb[0].mxu0
        %v1382 = vadd.f32 %v377, %v1381
        %v1383 = vpop.f32.mrb[0].mxu0
        %1384 = vmatprep.mubr.bf16.mxu0 0
        %1385 = vmatmul.mubr.bf16.gmra.mrb[0].mxu0 %v881
        %v1386 = vpop.f32.mrb[0].mxu0
        %v1387 = vadd.f32 %v377, %v1386
        %v1388 = vpop.f32.mrb[0].mxu0
        %v1389 = vpop.f32.mrb[0].mxu0
        %v1390 = vadd.f32 %v377, %v1389
        %v1391 = vpop.f32.mrb[0].mxu0
        %1392 = vmatprep.mubr.bf16.mxu0 0
        %1393 = vmatmul.mubr.bf16.gmra.mrb[0].mxu0 %v884
        %v1394 = vpop.f32.mrb[0].mxu0
        %v1395 = vadd.f32 %v377, %v1394
        %v1396 = vpop.f32.mrb[0].mxu0
        %v1397 = vpop.f32.mrb[0].mxu0
        %v1398 = vadd.f32 %v377, %v1397
        %v1399 = vpop.f32.mrb[0].mxu0
        %1400 = vmatprep.mubr.bf16.mxu0 0
        %1401 = vmatmul.mubr.bf16.gmra.mrb[0].mxu0 %v887
        %v1402 = vpop.f32.mrb[0].mxu0
        %v1403 = vadd.f32 %v377, %v1402
        %v1404 = vpop.f32.mrb[0].mxu0
        %v1405 = vpop.f32.mrb[0].mxu0
        %v1406 = vadd.f32 %v377, %v1405
        %v1407 = vpop.f32.mrb[0].mxu0
        %1408 = vmatprep.mubr.bf16.mxu0 0
        %1409 = vmatmul.mubr.bf16.gmra.mrb[0].mxu0 %v890
        %v1410 = vpop.f32.mrb[0].mxu0
        %v1411 = vadd.f32 %v377, %v1410
        %v1412 = vpop.f32.mrb[0].mxu0
        %v1413 = vpop.f32.mrb[0].mxu0
        %v1414 = vadd.f32 %v377, %v1413
        %v1415 = vpop.f32.mrb[0].mxu0
        %1416 = vmatprep.mubr.bf16.mxu0 0
        %1417 = vmatmul.mubr.bf16.gmra.mrb[0].mxu0 %v893
        %v1418 = vpop.f32.mrb[0].mxu0
        %v1419 = vadd.f32 %v377, %v1418
        %v1420 = vpop.f32.mrb[0].mxu0
        %v1421 = vpop.f32.mrb[0].mxu0
        %v1422 = vadd.f32 %v377, %v1421
        %v1423 = vpop.f32.mrb[0].mxu0
        %1424 = vmatprep.mubr.bf16.mxu0 0
        %1425 = vmatmul.mubr.bf16.gmra.mrb[0].mxu0 %v896
        %v1426 = vpop.f32.mrb[0].mxu0
        %v1427 = vadd.f32 %v377, %v1426
        %v1428 = vpop.f32.mrb[0].mxu0
        %v1429 = vpop.f32.mrb[0].mxu0
        %v1430 = vadd.f32 %v377, %v1429
        %v1431 = vpop.f32.mrb[0].mxu0
        %1432 = vmatprep.mubr.bf16.mxu0 0
        %1433 = vmatmul.mubr.bf16.gmra.mrb[0].mxu0 %v899
        %v1434 = vpop.f32.mrb[0].mxu0
        %v1435 = vadd.f32 %v377, %v1434
        %v1436 = vpop.f32.mrb[0].mxu0
        %v1437 = vpop.f32.mrb[0].mxu0
        %v1438 = vadd.f32 %v377, %v1437
        %v1439 = vpop.f32.mrb[0].mxu0
        %1440 = vmatprep.mubr.bf16.mxu0 0
        %1441 = vmatmul.mubr.bf16.gmra.mrb[0].mxu0 %v902
        %v1442 = vpop.f32.mrb[0].mxu0
        %v1443 = vadd.f32 %v377, %v1442
        %v1444 = vpop.f32.mrb[0].mxu0
        %v1445 = vpop.f32.mrb[0].mxu0
        %v1446 = vadd.f32 %v377, %v1445
        %v1447 = vpop.f32.mrb[0].mxu0
        %1448 = vdwg.mxu0
        %v1449 = vpack.c.bf16 %v942, %v939
        %v1450 = vpack.c.bf16 %v950, %v947
        %v1451 = vpack.c.bf16 %v958, %v955
        %v1452 = vpack.c.bf16 %v966, %v963
        %v1453 = vpack.c.bf16 %v974, %v971
        %v1454 = vpack.c.bf16 %v982, %v979
        %v1455 = vpack.c.bf16 %v990, %v987
        %v1456 = vpack.c.bf16 %v998, %v995
        %v1457 = vpack.c.bf16 %v1006, %v1003
        %v1458 = vpack.c.bf16 %v1014, %v1011
        %v1459 = vpack.c.bf16 %v1022, %v1019
        %v1460 = vpack.c.bf16 %v1030, %v1027
        %v1461 = vpack.c.bf16 %v1038, %v1035
        %v1462 = vpack.c.bf16 %v1046, %v1043
        %v1463 = vpack.c.bf16 %v1054, %v1051
        %v1464 = vpack.c.bf16 %v1062, %v1059
        %v1465 = vpack.c.bf16 %v1070, %v1067
        %v1466 = vpack.c.bf16 %v1078, %v1075
        %v1467 = vpack.c.bf16 %v1086, %v1083
        %v1468 = vpack.c.bf16 %v1094, %v1091
        %v1469 = vpack.c.bf16 %v1102, %v1099
        %v1470 = vpack.c.bf16 %v1110, %v1107
        %v1471 = vpack.c.bf16 %v1118, %v1115
        %v1472 = vpack.c.bf16 %v1126, %v1123
        %v1473 = vpack.c.bf16 %v1134, %v1131
        %v1474 = vpack.c.bf16 %v1142, %v1139
        %v1475 = vpack.c.bf16 %v1150, %v1147
        %v1476 = vpack.c.bf16 %v1158, %v1155
        %v1477 = vpack.c.bf16 %v1166, %v1163
        %v1478 = vpack.c.bf16 %v1174, %v1171
        %v1479 = vpack.c.bf16 %v1182, %v1179
        %v1480 = vpack.c.bf16 %v1190, %v1187
        %v1481 = vpack.c.bf16 %v1198, %v1195
        %v1482 = vpack.c.bf16 %v1206, %v1203
        %v1483 = vpack.c.bf16 %v1214, %v1211
        %v1484 = vpack.c.bf16 %v1222, %v1219
        %v1485 = vpack.c.bf16 %v1230, %v1227
        %v1486 = vpack.c.bf16 %v1238, %v1235
        %v1487 = vpack.c.bf16 %v1246, %v1243
        %v1488 = vpack.c.bf16 %v1254, %v1251
        %v1489 = vpack.c.bf16 %v1262, %v1259
        %v1490 = vpack.c.bf16 %v1270, %v1267
        %v1491 = vpack.c.bf16 %v1278, %v1275
        %v1492 = vpack.c.bf16 %v1286, %v1283
        %v1493 = vpack.c.bf16 %v1294, %v1291
        %v1494 = vpack.c.bf16 %v1302, %v1299
        %v1495 = vpack.c.bf16 %v1310, %v1307
        %v1496 = vpack.c.bf16 %v1318, %v1315
        %v1497 = vpack.c.bf16 %v1326, %v1323
        %v1498 = vpack.c.bf16 %v1334, %v1331
        %v1499 = vpack.c.bf16 %v1342, %v1339
        %v1500 = vpack.c.bf16 %v1350, %v1347
        %v1501 = vpack.c.bf16 %v1358, %v1355
        %v1502 = vpack.c.bf16 %v1366, %v1363
        %v1503 = vpack.c.bf16 %v1374, %v1371
        %v1504 = vpack.c.bf16 %v1382, %v1379
        %v1505 = vpack.c.bf16 %v1390, %v1387
        %v1506 = vpack.c.bf16 %v1398, %v1395
        %v1507 = vpack.c.bf16 %v1406, %v1403
        %v1508 = vpack.c.bf16 %v1414, %v1411
        %v1509 = vpack.c.bf16 %v1422, %v1419
        %v1510 = vpack.c.bf16 %v1430, %v1427
        %v1511 = vpack.c.bf16 %v1438, %v1435
        %v1512 = vpack.c.bf16 %v1446, %v1443
        %v1577 = vunpack.c.l.b16 %v1449
        %v1578 = vunpack.c.h.b16 %v1449
        %v1579 = vunpack.c.l.b16 %v1450
        %v1580 = vunpack.c.h.b16 %v1450
        %v1581 = vunpack.c.l.b16 %v1451
        %v1582 = vunpack.c.h.b16 %v1451
        %v1583 = vunpack.c.l.b16 %v1452
        %v1584 = vunpack.c.h.b16 %v1452
        %v1585 = vunpack.c.l.b16 %v1453
        %v1586 = vunpack.c.h.b16 %v1453
        %v1587 = vunpack.c.l.b16 %v1454
        %v1588 = vunpack.c.h.b16 %v1454
        %v1589 = vunpack.c.l.b16 %v1455
        %v1590 = vunpack.c.h.b16 %v1455
        %v1591 = vunpack.c.l.b16 %v1456
        %v1592 = vunpack.c.h.b16 %v1456
        %v1593 = vunpack.c.l.b16 %v1457
        %v1594 = vunpack.c.h.b16 %v1457
        %v1595 = vunpack.c.l.b16 %v1458
        %v1596 = vunpack.c.h.b16 %v1458
        %v1597 = vunpack.c.l.b16 %v1459
        %v1598 = vunpack.c.h.b16 %v1459
        %v1599 = vunpack.c.l.b16 %v1460
        %v1600 = vunpack.c.h.b16 %v1460
        %v1601 = vunpack.c.l.b16 %v1461
        %v1602 = vunpack.c.h.b16 %v1461
        %v1603 = vunpack.c.l.b16 %v1462
        %v1604 = vunpack.c.h.b16 %v1462
        %v1605 = vunpack.c.l.b16 %v1463
        %v1606 = vunpack.c.h.b16 %v1463
        %v1607 = vunpack.c.l.b16 %v1464
        %v1608 = vunpack.c.h.b16 %v1464
        %v1609 = vunpack.c.l.b16 %v1465
        %v1610 = vunpack.c.h.b16 %v1465
        %v1611 = vunpack.c.l.b16 %v1466
        %v1612 = vunpack.c.h.b16 %v1466
        %v1613 = vunpack.c.l.b16 %v1467
        %v1614 = vunpack.c.h.b16 %v1467
        %v1615 = vunpack.c.l.b16 %v1468
        %v1616 = vunpack.c.h.b16 %v1468
        %v1617 = vunpack.c.l.b16 %v1469
        %v1618 = vunpack.c.h.b16 %v1469
        %v1619 = vunpack.c.l.b16 %v1470
        %v1620 = vunpack.c.h.b16 %v1470
        %v1621 = vunpack.c.l.b16 %v1471
        %v1622 = vunpack.c.h.b16 %v1471
        %v1623 = vunpack.c.l.b16 %v1472
        %v1624 = vunpack.c.h.b16 %v1472
        %v1625 = vunpack.c.l.b16 %v1473
        %v1626 = vunpack.c.h.b16 %v1473
        %v1627 = vunpack.c.l.b16 %v1474
        %v1628 = vunpack.c.h.b16 %v1474
        %v1629 = vunpack.c.l.b16 %v1475
        %v1630 = vunpack.c.h.b16 %v1475
        %v1631 = vunpack.c.l.b16 %v1476
        %v1632 = vunpack.c.h.b16 %v1476
        %v1633 = vunpack.c.l.b16 %v1477
        %v1634 = vunpack.c.h.b16 %v1477
        %v1635 = vunpack.c.l.b16 %v1478
        %v1636 = vunpack.c.h.b16 %v1478
        %v1637 = vunpack.c.l.b16 %v1479
        %v1638 = vunpack.c.h.b16 %v1479
        %v1639 = vunpack.c.l.b16 %v1480
        %v1640 = vunpack.c.h.b16 %v1480
        %v1641 = vunpack.c.l.b16 %v1481
        %v1642 = vunpack.c.h.b16 %v1481
        %v1643 = vunpack.c.l.b16 %v1482
        %v1644 = vunpack.c.h.b16 %v1482
        %v1645 = vunpack.c.l.b16 %v1483
        %v1646 = vunpack.c.h.b16 %v1483
        %v1647 = vunpack.c.l.b16 %v1484
        %v1648 = vunpack.c.h.b16 %v1484
        %v1649 = vunpack.c.l.b16 %v1485
        %v1650 = vunpack.c.h.b16 %v1485
        %v1651 = vunpack.c.l.b16 %v1486
        %v1652 = vunpack.c.h.b16 %v1486
        %v1653 = vunpack.c.l.b16 %v1487
        %v1654 = vunpack.c.h.b16 %v1487
        %v1655 = vunpack.c.l.b16 %v1488
        %v1656 = vunpack.c.h.b16 %v1488
        %v1657 = vunpack.c.l.b16 %v1489
        %v1658 = vunpack.c.h.b16 %v1489
        %v1659 = vunpack.c.l.b16 %v1490
        %v1660 = vunpack.c.h.b16 %v1490
        %v1661 = vunpack.c.l.b16 %v1491
        %v1662 = vunpack.c.h.b16 %v1491
        %v1663 = vunpack.c.l.b16 %v1492
        %v1664 = vunpack.c.h.b16 %v1492
        %v1665 = vunpack.c.l.b16 %v1493
        %v1666 = vunpack.c.h.b16 %v1493
        %v1667 = vunpack.c.l.b16 %v1494
        %v1668 = vunpack.c.h.b16 %v1494
        %v1669 = vunpack.c.l.b16 %v1495
        %v1670 = vunpack.c.h.b16 %v1495
        %v1671 = vunpack.c.l.b16 %v1496
        %v1672 = vunpack.c.h.b16 %v1496
        %v1673 = vunpack.c.l.b16 %v1497
        %v1674 = vunpack.c.h.b16 %v1497
        %v1675 = vunpack.c.l.b16 %v1498
        %v1676 = vunpack.c.h.b16 %v1498
        %v1677 = vunpack.c.l.b16 %v1499
        %v1678 = vunpack.c.h.b16 %v1499
        %v1679 = vunpack.c.l.b16 %v1500
        %v1680 = vunpack.c.h.b16 %v1500
        %v1681 = vunpack.c.l.b16 %v1501
        %v1682 = vunpack.c.h.b16 %v1501
        %v1683 = vunpack.c.l.b16 %v1502
        %v1684 = vunpack.c.h.b16 %v1502
        %v1685 = vunpack.c.l.b16 %v1503
        %v1686 = vunpack.c.h.b16 %v1503
        %v1687 = vunpack.c.l.b16 %v1504
        %v1688 = vunpack.c.h.b16 %v1504
        %v1689 = vunpack.c.l.b16 %v1505
        %v1690 = vunpack.c.h.b16 %v1505
        %v1691 = vunpack.c.l.b16 %v1506
        %v1692 = vunpack.c.h.b16 %v1506
        %v1693 = vunpack.c.l.b16 %v1507
        %v1694 = vunpack.c.h.b16 %v1507
        %v1695 = vunpack.c.l.b16 %v1508
        %v1696 = vunpack.c.h.b16 %v1508
        %v1697 = vunpack.c.l.b16 %v1509
        %v1698 = vunpack.c.h.b16 %v1509
        %v1699 = vunpack.c.l.b16 %v1510
        %v1700 = vunpack.c.h.b16 %v1510
        %v1701 = vunpack.c.l.b16 %v1511
        %v1702 = vunpack.c.h.b16 %v1511
        %v1703 = vunpack.c.l.b16 %v1512
        %v1704 = vunpack.c.h.b16 %v1512
        %v1705 = vpack.c.b16 %v1577, %v1577
        %v1706 = vpack.c.b16 %v1578, %v1578
        %v1707 = vpack.c.b16 %v1579, %v1579
        %v1708 = vpack.c.b16 %v1580, %v1580
        %v1709 = vpack.c.b16 %v1581, %v1581
        %v1710 = vpack.c.b16 %v1582, %v1582
        %v1711 = vpack.c.b16 %v1583, %v1583
        %v1712 = vpack.c.b16 %v1584, %v1584
        %v1713 = vpack.c.b16 %v1585, %v1585
        %v1714 = vpack.c.b16 %v1586, %v1586
        %v1715 = vpack.c.b16 %v1587, %v1587
        %v1716 = vpack.c.b16 %v1588, %v1588
        %v1717 = vpack.c.b16 %v1589, %v1589
        %v1718 = vpack.c.b16 %v1590, %v1590
        %v1719 = vpack.c.b16 %v1591, %v1591
        %v1720 = vpack.c.b16 %v1592, %v1592
        %v1721 = vpack.c.b16 %v1593, %v1593
        %v1722 = vpack.c.b16 %v1594, %v1594
        %v1723 = vpack.c.b16 %v1595, %v1595
        %v1724 = vpack.c.b16 %v1596, %v1596
        %v1725 = vpack.c.b16 %v1597, %v1597
        %v1726 = vpack.c.b16 %v1598, %v1598
        %v1727 = vpack.c.b16 %v1599, %v1599
        %v1728 = vpack.c.b16 %v1600, %v1600
        %v1729 = vpack.c.b16 %v1601, %v1601
        %v1730 = vpack.c.b16 %v1602, %v1602
        %v1731 = vpack.c.b16 %v1603, %v1603
        %v1732 = vpack.c.b16 %v1604, %v1604
        %v1733 = vpack.c.b16 %v1605, %v1605
        %v1734 = vpack.c.b16 %v1606, %v1606
        %v1735 = vpack.c.b16 %v1607, %v1607
        %v1736 = vpack.c.b16 %v1608, %v1608
        %v1737 = vpack.c.b16 %v1609, %v1609
        %v1738 = vpack.c.b16 %v1610, %v1610
        %v1739 = vpack.c.b16 %v1611, %v1611
        %v1740 = vpack.c.b16 %v1612, %v1612
        %v1741 = vpack.c.b16 %v1613, %v1613
        %v1742 = vpack.c.b16 %v1614, %v1614
        %v1743 = vpack.c.b16 %v1615, %v1615
        %v1744 = vpack.c.b16 %v1616, %v1616
        %v1745 = vpack.c.b16 %v1617, %v1617
        %v1746 = vpack.c.b16 %v1618, %v1618
        %v1747 = vpack.c.b16 %v1619, %v1619
        %v1748 = vpack.c.b16 %v1620, %v1620
        %v1749 = vpack.c.b16 %v1621, %v1621
        %v1750 = vpack.c.b16 %v1622, %v1622
        %v1751 = vpack.c.b16 %v1623, %v1623
        %v1752 = vpack.c.b16 %v1624, %v1624
        %v1753 = vpack.c.b16 %v1625, %v1625
        %v1754 = vpack.c.b16 %v1626, %v1626
        %v1755 = vpack.c.b16 %v1627, %v1627
        %v1756 = vpack.c.b16 %v1628, %v1628
        %v1757 = vpack.c.b16 %v1629, %v1629
        %v1758 = vpack.c.b16 %v1630, %v1630
        %v1759 = vpack.c.b16 %v1631, %v1631
        %v1760 = vpack.c.b16 %v1632, %v1632
        %v1761 = vpack.c.b16 %v1633, %v1633
        %v1762 = vpack.c.b16 %v1634, %v1634
        %v1763 = vpack.c.b16 %v1635, %v1635
        %v1764 = vpack.c.b16 %v1636, %v1636
        %v1765 = vpack.c.b16 %v1637, %v1637
        %v1766 = vpack.c.b16 %v1638, %v1638
        %v1767 = vpack.c.b16 %v1639, %v1639
        %v1768 = vpack.c.b16 %v1640, %v1640
        %v1769 = vpack.c.b16 %v1641, %v1641
        %v1770 = vpack.c.b16 %v1642, %v1642
        %v1771 = vpack.c.b16 %v1643, %v1643
        %v1772 = vpack.c.b16 %v1644, %v1644
        %v1773 = vpack.c.b16 %v1645, %v1645
        %v1774 = vpack.c.b16 %v1646, %v1646
        %v1775 = vpack.c.b16 %v1647, %v1647
        %v1776 = vpack.c.b16 %v1648, %v1648
        %v1777 = vpack.c.b16 %v1649, %v1649
        %v1778 = vpack.c.b16 %v1650, %v1650
        %v1779 = vpack.c.b16 %v1651, %v1651
        %v1780 = vpack.c.b16 %v1652, %v1652
        %v1781 = vpack.c.b16 %v1653, %v1653
        %v1782 = vpack.c.b16 %v1654, %v1654
        %v1783 = vpack.c.b16 %v1655, %v1655
        %v1784 = vpack.c.b16 %v1656, %v1656
        %v1785 = vpack.c.b16 %v1657, %v1657
        %v1786 = vpack.c.b16 %v1658, %v1658
        %v1787 = vpack.c.b16 %v1659, %v1659
        %v1788 = vpack.c.b16 %v1660, %v1660
        %v1789 = vpack.c.b16 %v1661, %v1661
        %v1790 = vpack.c.b16 %v1662, %v1662
        %v1791 = vpack.c.b16 %v1663, %v1663
        %v1792 = vpack.c.b16 %v1664, %v1664
        %v1793 = vpack.c.b16 %v1665, %v1665
        %v1794 = vpack.c.b16 %v1666, %v1666
        %v1795 = vpack.c.b16 %v1667, %v1667
        %v1796 = vpack.c.b16 %v1668, %v1668
        %v1797 = vpack.c.b16 %v1669, %v1669
        %v1798 = vpack.c.b16 %v1670, %v1670
        %v1799 = vpack.c.b16 %v1671, %v1671
        %v1800 = vpack.c.b16 %v1672, %v1672
        %v1801 = vpack.c.b16 %v1673, %v1673
        %v1802 = vpack.c.b16 %v1674, %v1674
        %v1803 = vpack.c.b16 %v1675, %v1675
        %v1804 = vpack.c.b16 %v1676, %v1676
        %v1805 = vpack.c.b16 %v1677, %v1677
        %v1806 = vpack.c.b16 %v1678, %v1678
        %v1807 = vpack.c.b16 %v1679, %v1679
        %v1808 = vpack.c.b16 %v1680, %v1680
        %v1809 = vpack.c.b16 %v1681, %v1681
        %v1810 = vpack.c.b16 %v1682, %v1682
        %v1811 = vpack.c.b16 %v1683, %v1683
        %v1812 = vpack.c.b16 %v1684, %v1684
        %v1813 = vpack.c.b16 %v1685, %v1685
        %v1814 = vpack.c.b16 %v1686, %v1686
        %v1815 = vpack.c.b16 %v1687, %v1687
        %v1816 = vpack.c.b16 %v1688, %v1688
        %v1817 = vpack.c.b16 %v1689, %v1689
        %v1818 = vpack.c.b16 %v1690, %v1690
        %v1819 = vpack.c.b16 %v1691, %v1691
        %v1820 = vpack.c.b16 %v1692, %v1692
        %v1821 = vpack.c.b16 %v1693, %v1693
        %v1822 = vpack.c.b16 %v1694, %v1694
        %v1823 = vpack.c.b16 %v1695, %v1695
        %v1824 = vpack.c.b16 %v1696, %v1696
        %v1825 = vpack.c.b16 %v1697, %v1697
        %v1826 = vpack.c.b16 %v1698, %v1698
        %v1827 = vpack.c.b16 %v1699, %v1699
        %v1828 = vpack.c.b16 %v1700, %v1700
        %v1829 = vpack.c.b16 %v1701, %v1701
        %v1830 = vpack.c.b16 %v1702, %v1702
        %v1831 = vpack.c.b16 %v1703, %v1703
        %v1832 = vpack.c.b16 %v1704, %v1704
        %1961 = vst [vmem:[%s235] sm:$0xf] %v1705
        %1962 = vst [vmem:[%s235 + $0x4] sm:$0xf] %v1706
        %1963 = vst [vmem:[%s235 + $0x8] sm:$0xf] %v1707
        %1964 = vst [vmem:[%s235 + $0xc] sm:$0xf] %v1708
        %1965 = vst [vmem:[%s235 + $0x10] sm:$0xf] %v1709
        %1966 = vst [vmem:[%s235 + $0x14] sm:$0xf] %v1710
        %1967 = vst [vmem:[%s235 + $0x18] sm:$0xf] %v1711
        %1968 = vst [vmem:[%s235 + $0x1c] sm:$0xf] %v1712
        %1969 = vst [vmem:[%s235 + $0x20] sm:$0xf] %v1713
        %1970 = vst [vmem:[%s235 + $0x24] sm:$0xf] %v1714
        %1971 = vst [vmem:[%s235 + $0x28] sm:$0xf] %v1715
        %1972 = vst [vmem:[%s235 + $0x2c] sm:$0xf] %v1716
        %1973 = vst [vmem:[%s235 + $0x30] sm:$0xf] %v1717
        %1974 = vst [vmem:[%s235 + $0x34] sm:$0xf] %v1718
        %1975 = vst [vmem:[%s235 + $0x38] sm:$0xf] %v1719
        %1976 = vst [vmem:[%s235 + $0x3c] sm:$0xf] %v1720
        %1977 = vst [vmem:[%s235 + $0x40] sm:$0xf] %v1721
        %1978 = vst [vmem:[%s235 + $0x44] sm:$0xf] %v1722
        %1979 = vst [vmem:[%s235 + $0x48] sm:$0xf] %v1723
        %1980 = vst [vmem:[%s235 + $0x4c] sm:$0xf] %v1724
        %1981 = vst [vmem:[%s235 + $0x50] sm:$0xf] %v1725
        %1982 = vst [vmem:[%s235 + $0x54] sm:$0xf] %v1726
        %1983 = vst [vmem:[%s235 + $0x58] sm:$0xf] %v1727
        %1984 = vst [vmem:[%s235 + $0x5c] sm:$0xf] %v1728
        %1985 = vst [vmem:[%s235 + $0x60] sm:$0xf] %v1729
        %1986 = vst [vmem:[%s235 + $0x64] sm:$0xf] %v1730
        %1987 = vst [vmem:[%s235 + $0x68] sm:$0xf] %v1731
        %1988 = vst [vmem:[%s235 + $0x6c] sm:$0xf] %v1732
        %1989 = vst [vmem:[%s235 + $0x70] sm:$0xf] %v1733
        %1990 = vst [vmem:[%s235 + $0x74] sm:$0xf] %v1734
        %1991 = vst [vmem:[%s235 + $0x78] sm:$0xf] %v1735
        %1992 = vst [vmem:[%s235 + $0x7c] sm:$0xf] %v1736
        %1993 = vst [vmem:[%s235 + $0x80] sm:$0xf] %v1737
        %1994 = vst [vmem:[%s235 + $0x84] sm:$0xf] %v1738
        %1995 = vst [vmem:[%s235 + $0x88] sm:$0xf] %v1739
        %1996 = vst [vmem:[%s235 + $0x8c] sm:$0xf] %v1740
        %1997 = vst [vmem:[%s235 + $0x90] sm:$0xf] %v1741
        %1998 = vst [vmem:[%s235 + $0x94] sm:$0xf] %v1742
        %1999 = vst [vmem:[%s235 + $0x98] sm:$0xf] %v1743
        %2000 = vst [vmem:[%s235 + $0x9c] sm:$0xf] %v1744
        %2001 = vst [vmem:[%s235 + $0xa0] sm:$0xf] %v1745
        %2002 = vst [vmem:[%s235 + $0xa4] sm:$0xf] %v1746
        %2003 = vst [vmem:[%s235 + $0xa8] sm:$0xf] %v1747
        %2004 = vst [vmem:[%s235 + $0xac] sm:$0xf] %v1748
        %2005 = vst [vmem:[%s235 + $0xb0] sm:$0xf] %v1749
        %2006 = vst [vmem:[%s235 + $0xb4] sm:$0xf] %v1750
        %2007 = vst [vmem:[%s235 + $0xb8] sm:$0xf] %v1751
        %2008 = vst [vmem:[%s235 + $0xbc] sm:$0xf] %v1752
        %2009 = vst [vmem:[%s235 + $0xc0] sm:$0xf] %v1753
        %2010 = vst [vmem:[%s235 + $0xc4] sm:$0xf] %v1754
        %2011 = vst [vmem:[%s235 + $0xc8] sm:$0xf] %v1755
        %2012 = vst [vmem:[%s235 + $0xcc] sm:$0xf] %v1756
        %2013 = vst [vmem:[%s235 + $0xd0] sm:$0xf] %v1757
        %2014 = vst [vmem:[%s235 + $0xd4] sm:$0xf] %v1758
        %2015 = vst [vmem:[%s235 + $0xd8] sm:$0xf] %v1759
        %2016 = vst [vmem:[%s235 + $0xdc] sm:$0xf] %v1760
        %2017 = vst [vmem:[%s235 + $0xe0] sm:$0xf] %v1761
        %2018 = vst [vmem:[%s235 + $0xe4] sm:$0xf] %v1762
        %2019 = vst [vmem:[%s235 + $0xe8] sm:$0xf] %v1763
        %2020 = vst [vmem:[%s235 + $0xec] sm:$0xf] %v1764
        %2021 = vst [vmem:[%s235 + $0xf0] sm:$0xf] %v1765
        %2022 = vst [vmem:[%s235 + $0xf4] sm:$0xf] %v1766
        %2023 = vst [vmem:[%s235 + $0xf8] sm:$0xf] %v1767
        %2024 = vst [vmem:[%s235 + $0xfc] sm:$0xf] %v1768
        %2025 = vst [vmem:[%s235 + $0x100] sm:$0xf] %v1769
        %2026 = vst [vmem:[%s235 + $0x104] sm:$0xf] %v1770
        %2027 = vst [vmem:[%s235 + $0x108] sm:$0xf] %v1771
        %2028 = vst [vmem:[%s235 + $0x10c] sm:$0xf] %v1772
        %2029 = vst [vmem:[%s235 + $0x110] sm:$0xf] %v1773
        %2030 = vst [vmem:[%s235 + $0x114] sm:$0xf] %v1774
        %2031 = vst [vmem:[%s235 + $0x118] sm:$0xf] %v1775
        %2032 = vst [vmem:[%s235 + $0x11c] sm:$0xf] %v1776
        %2033 = vst [vmem:[%s235 + $0x120] sm:$0xf] %v1777
        %2034 = vst [vmem:[%s235 + $0x124] sm:$0xf] %v1778
        %2035 = vst [vmem:[%s235 + $0x128] sm:$0xf] %v1779
        %2036 = vst [vmem:[%s235 + $0x12c] sm:$0xf] %v1780
        %2037 = vst [vmem:[%s235 + $0x130] sm:$0xf] %v1781
        %2038 = vst [vmem:[%s235 + $0x134] sm:$0xf] %v1782
        %2039 = vst [vmem:[%s235 + $0x138] sm:$0xf] %v1783
        %2040 = vst [vmem:[%s235 + $0x13c] sm:$0xf] %v1784
        %2041 = vst [vmem:[%s235 + $0x140] sm:$0xf] %v1785
        %2042 = vst [vmem:[%s235 + $0x144] sm:$0xf] %v1786
        %2043 = vst [vmem:[%s235 + $0x148] sm:$0xf] %v1787
        %2044 = vst [vmem:[%s235 + $0x14c] sm:$0xf] %v1788
        %2045 = vst [vmem:[%s235 + $0x150] sm:$0xf] %v1789
        %2046 = vst [vmem:[%s235 + $0x154] sm:$0xf] %v1790
        %2047 = vst [vmem:[%s235 + $0x158] sm:$0xf] %v1791
        %2048 = vst [vmem:[%s235 + $0x15c] sm:$0xf] %v1792
        %2049 = vst [vmem:[%s235 + $0x160] sm:$0xf] %v1793
        %2050 = vst [vmem:[%s235 + $0x164] sm:$0xf] %v1794
        %2051 = vst [vmem:[%s235 + $0x168] sm:$0xf] %v1795
        %2052 = vst [vmem:[%s235 + $0x16c] sm:$0xf] %v1796
        %2053 = vst [vmem:[%s235 + $0x170] sm:$0xf] %v1797
        %2054 = vst [vmem:[%s235 + $0x174] sm:$0xf] %v1798
        %2055 = vst [vmem:[%s235 + $0x178] sm:$0xf] %v1799
        %2056 = vst [vmem:[%s235 + $0x17c] sm:$0xf] %v1800
        %2057 = vst [vmem:[%s235 + $0x180] sm:$0xf] %v1801
        %2058 = vst [vmem:[%s235 + $0x184] sm:$0xf] %v1802
        %2059 = vst [vmem:[%s235 + $0x188] sm:$0xf] %v1803
        %2060 = vst [vmem:[%s235 + $0x18c] sm:$0xf] %v1804
        %2061 = vst [vmem:[%s235 + $0x190] sm:$0xf] %v1805
        %2062 = vst [vmem:[%s235 + $0x194] sm:$0xf] %v1806
        %2063 = vst [vmem:[%s235 + $0x198] sm:$0xf] %v1807
        %2064 = vst [vmem:[%s235 + $0x19c] sm:$0xf] %v1808
        %2065 = vst [vmem:[%s235 + $0x1a0] sm:$0xf] %v1809
        %2066 = vst [vmem:[%s235 + $0x1a4] sm:$0xf] %v1810
        %2067 = vst [vmem:[%s235 + $0x1a8] sm:$0xf] %v1811
        %2068 = vst [vmem:[%s235 + $0x1ac] sm:$0xf] %v1812
        %2069 = vst [vmem:[%s235 + $0x1b0] sm:$0xf] %v1813
        %2070 = vst [vmem:[%s235 + $0x1b4] sm:$0xf] %v1814
        %2071 = vst [vmem:[%s235 + $0x1b8] sm:$0xf] %v1815
        %2072 = vst [vmem:[%s235 + $0x1bc] sm:$0xf] %v1816
        %2073 = vst [vmem:[%s235 + $0x1c0] sm:$0xf] %v1817
        %2074 = vst [vmem:[%s235 + $0x1c4] sm:$0xf] %v1818
        %2075 = vst [vmem:[%s235 + $0x1c8] sm:$0xf] %v1819
        %2076 = vst [vmem:[%s235 + $0x1cc] sm:$0xf] %v1820
        %2077 = vst [vmem:[%s235 + $0x1d0] sm:$0xf] %v1821
        %2078 = vst [vmem:[%s235 + $0x1d4] sm:$0xf] %v1822
        %2079 = vst [vmem:[%s235 + $0x1d8] sm:$0xf] %v1823
        %2080 = vst [vmem:[%s235 + $0x1dc] sm:$0xf] %v1824
        %2081 = vst [vmem:[%s235 + $0x1e0] sm:$0xf] %v1825
        %2082 = vst [vmem:[%s235 + $0x1e4] sm:$0xf] %v1826
        %2083 = vst [vmem:[%s235 + $0x1e8] sm:$0xf] %v1827
        %2084 = vst [vmem:[%s235 + $0x1ec] sm:$0xf] %v1828
        %2085 = vst [vmem:[%s235 + $0x1f0] sm:$0xf] %v1829
        %2086 = vst [vmem:[%s235 + $0x1f4] sm:$0xf] %v1830
        %2087 = vst [vmem:[%s235 + $0x1f8] sm:$0xf] %v1831
        %2088 = vst [vmem:[%s235 + $0x1fc] sm:$0xf] %v1832
        %s2089 = sand.u32 %s121, 1
        %s2090 = scalar_lea.sflag [#allocation4], %s2089
        %s2091 = sand.u32 %s121, 1
        %s2092 = smul.addr %s2091, 512
        %s2093 = scalar_lea.vmem [#allocation7], %s2092
        // Predicated region
        $region41: #{tpu_custom_call.1} parent=31 // pred_check
          %p2094 = pneg %p131
        $region42: #{tpu_custom_call.1} parent=31 // pred_check_branch
          %2096 = sbr.rel (%p2094) target = $region44
        $region43: #{tpu_custom_call.1} parent=31 // pred_region
          %s2098 = ssub.s32 8192, 8192
          %2099 = vsyncadd %s2090, %s2098
          %s2100 = smul.addr %s26, 128
          %s2101 = sadd.s32 %s25, %s2100
          %s2102 = smul.addr %s2101, 64
          %s2103 = scalar_lea.hbm %s3, %s2102
          %s2104 = sshll.u32 %s2093, 4
          %s2105 = int_to_ptr.vmem [resolvable:$true] %s2104
          %2110 = dma.vmem_to_hbm [thread:$0]  %s2105, 8192, %s2103, %s2090, 64, 64, 4
        $region44: #{tpu_custom_call.1} parent=31 // pred_fallthru
          _
      $region32: #{tpu_custom_call.1} parent=5 // pred_fallthru
        _
      %p2111 = scmp.le.s32.totalorder 2, %s16
      // Predicated region
      $region45: #{tpu_custom_call.1} parent=5 // pred_check
        %p2112 = pneg %p2111
      $region46: #{tpu_custom_call.1} parent=5 // pred_check_branch
        %2114 = sbr.rel (%p2112) target = $region48
      $region47: #{tpu_custom_call.1} parent=5 // pred_region
        %s2115 = ssub.s32 %s16, 2
        // Predicated region
        $region49: #{tpu_custom_call.1} parent=47 // pred_check
          %p2116 = pneg %p137
        $region50: #{tpu_custom_call.1} parent=47 // pred_check_branch
          %2118 = sbr.rel (%p2116) target = $region52
        $region51: #{tpu_custom_call.1} parent=47 // pred_region
          %s2119 = sand.u32 %s122, 1
          %s2120 = scalar_lea.sflag [#allocation4], %s2119
          %s2121 = sand.u32 %s122, 1
          %s2122 = smul.addr %s2121, 512
          %s2123 = scalar_lea.vmem [#allocation7], %s2122
          %2124 = dma.done %s2120, 8192
        $region52: #{tpu_custom_call.1} parent=47 // pred_fallthru
          _
      $region48: #{tpu_custom_call.1} parent=5 // pred_fallthru
        _
    $region6: #{tpu_custom_call.1} parent=1 // loop_footer
      %s20 = sadd.s32 1, %s16
    $region7: #{tpu_custom_call.1} parent=1 // loop_footer_branch
      %15 = sbr.rel target = $region3
    $region8: #{tpu_custom_call.1} parent=1 // loop_exit
      _
    %2125 = vsyncpa [#allocation3], 1
    %s2126 = scalar_lea.sflag [#allocation3], 1
    %2127 = vsyncpa %s2126, 1
    %2128 = vsyncpa [#allocation6], 1
    %2129 = vsyncpa [#allocation4], 1
    %s2130 = scalar_lea.sflag [#allocation4], 1
    %2131 = vsyncpa %s2130, 1

</llo_original>
